<compile_context>
chip_gen: v5e
topology: v5e:2x2
jax: 0.10.0
libtpu: 0.0.40
codegen_flags: <defaults>
</compile_context>

<pallas_src>
import math
import functools

import jax
import jax.numpy as jnp
from jax.experimental import pallas as pl
from jax.experimental.pallas import tpu as pltpu


# ----------------------------------------------------------------------------
# Fused transformer kernel: grid axis 0 = encoder layer index.
# act_ref (VMEM scratch) carries the (N*S, E) activations across layers.
# ----------------------------------------------------------------------------
def _transformer_kernel(x_ref, mask_ref,
                        wqkv_ref, bqkv_ref, wo_ref, bo_ref,
                        ln1w_ref, ln1b_ref, lin1w_ref, lin1b_ref,
                        lin2w_ref, lin2b_ref, ln2w_ref, ln2b_ref,
                        decw_ref, decb_ref,
                        o_ref, act_ref, *, nhead):
    l = pl.program_id(0)
    nlayers = pl.num_programs(0)

    @pl.when(l == 0)
    def _():
        act_ref[...] = x_ref[...].astype(jnp.float32)

    x2 = act_ref[...]                              # (N*S, E) f32
    NS, E = x2.shape
    S = mask_ref.shape[0]
    N = NS // S
    hd = E // nhead
    scale = 1.0 / math.sqrt(hd)

    # ---- self-attention: fused QKV projection, batched over sequences ----
    qkv = jnp.dot(x2, wqkv_ref[0], preferred_element_type=jnp.float32) + bqkv_ref[0]
    qkv3 = qkv.reshape(N, S, 3 * E)                # sublane-aligned split (S % 8 == 0)
    mask = mask_ref[...]                           # (S, S) additive causal mask

    heads = []
    for h in range(nhead):                         # static unroll over heads
        qh = qkv3[:, :, h * hd:(h + 1) * hd] * scale
        kh = qkv3[:, :, E + h * hd:E + (h + 1) * hd]
        vh = qkv3[:, :, 2 * E + h * hd:2 * E + (h + 1) * hd]
        s = jnp.einsum('nqd,nkd->nqk', qh, kh,
                       preferred_element_type=jnp.float32) + mask
        s = s - jnp.max(s, axis=-1, keepdims=True)
        p = jnp.exp(s)
        p = p * pl.reciprocal(jnp.sum(p, axis=-1, keepdims=True), approx=True)
        heads.append(jnp.einsum('nqk,nkd->nqd', p, vh,
                                preferred_element_type=jnp.float32))
    attn = jnp.concatenate(heads, axis=-1).reshape(NS, E)
    # single output projection (weights pre-transposed host-side)
    attn = jnp.dot(attn, wo_ref[0], preferred_element_type=jnp.float32) + bo_ref[0]

    # ---- residual + LayerNorm 1 (eps=1e-5, biased variance, like PyTorch) ----
    h1 = x2 + attn
    mu1 = jnp.mean(h1, axis=-1, keepdims=True)
    var1 = jnp.mean((h1 - mu1) ** 2, axis=-1, keepdims=True)
    h1 = (h1 - mu1) * jax.lax.rsqrt(var1 + 1e-5) * ln1w_ref[0] + ln1b_ref[0]

    # ---- feed-forward: relu(h1 @ W1) @ W2 (weights pre-transposed) ----
    f = jnp.dot(h1, lin1w_ref[0], preferred_element_type=jnp.float32) + lin1b_ref[0]
    f = jnp.maximum(f, 0.0)
    f = jnp.dot(f, lin2w_ref[0], preferred_element_type=jnp.float32) + lin2b_ref[0]

    # ---- residual + LayerNorm 2 ----
    h2 = h1 + f
    mu2 = jnp.mean(h2, axis=-1, keepdims=True)
    var2 = jnp.mean((h2 - mu2) ** 2, axis=-1, keepdims=True)
    h2 = (h2 - mu2) * jax.lax.rsqrt(var2 + 1e-5) * ln2w_ref[0] + ln2b_ref[0]

    act_ref[...] = h2

    # ---- decoder projection only on the final layer step (lane-dense Vp) ----
    @pl.when(l == nlayers - 1)
    def _():
        logits = jnp.dot(h2, decw_ref[...],
                         preferred_element_type=jnp.float32) + decb_ref[...]
        o_ref[...] = logits.astype(o_ref.dtype)


# ----------------------------------------------------------------------------
# Parameter init (PyTorch layout) and one-time host-side packing
# ----------------------------------------------------------------------------
def positional_encoding(S, E):
    pos = jnp.arange(S, dtype=jnp.float32)[:, None]
    div = jnp.exp(jnp.arange(0, E, 2, dtype=jnp.float32) * (-math.log(10000.0) / E))
    pe = jnp.zeros((S, E), jnp.float32)
    pe = pe.at[:, 0::2].set(jnp.sin(pos * div))
    pe = pe.at[:, 1::2].set(jnp.cos(pos * div))
    return pe


def init_params(key, ntoken, E, nlayers, nhid):
    """Parameters in PyTorch layout (weights are out_features x in_features)."""
    keys = jax.random.split(key, 2 + nlayers)
    emb = jax.random.uniform(keys[0], (ntoken, E), jnp.float32, -0.1, 0.1)
    dec_w = jax.random.uniform(keys[1], (ntoken, E), jnp.float32, -0.1, 0.1)
    dec_b = jnp.zeros((ntoken,), jnp.float32)
    layers = []
    for i in range(nlayers):
        lk = jax.random.split(keys[2 + i], 4)
        layers.append(dict(
            wqkv=(jax.random.normal(lk[0], (3 * E, E)) * 0.05).astype(jnp.float32),
            bqkv=jnp.zeros((3 * E,), jnp.float32),
            wo=(jax.random.normal(lk[1], (E, E)) * 0.05).astype(jnp.float32),
            bo=jnp.zeros((E,), jnp.float32),
            ln1_w=jnp.ones((E,), jnp.float32), ln1_b=jnp.zeros((E,), jnp.float32),
            lin1_w=(jax.random.normal(lk[2], (nhid, E)) * 0.05).astype(jnp.float32),
            lin1_b=jnp.zeros((nhid,), jnp.float32),
            lin2_w=(jax.random.normal(lk[3], (E, nhid)) * 0.05).astype(jnp.float32),
            lin2_b=jnp.zeros((E,), jnp.float32),
            ln2_w=jnp.ones((E,), jnp.float32), ln2_b=jnp.zeros((E,), jnp.float32),
        ))
    return emb, dec_w, dec_b, layers


def prepare_weights(dec_w, dec_b, layers):
    """One-time pre-transpose + stack so the kernel never transposes weights."""
    def stack(fn):
        return jnp.stack([fn(p) for p in layers], axis=0)

    V, E = dec_w.shape
    Vp = ((V + 127) // 128) * 128                  # pad vocab to lane-dense width
    packed = dict(
        wqkv=stack(lambda p: p["wqkv"].T),         # (L, E, 3E)
        bqkv=stack(lambda p: p["bqkv"][None, :]),  # (L, 1, 3E)
        wo=stack(lambda p: p["wo"].T),             # (L, E, E)
        bo=stack(lambda p: p["bo"][None, :]),
        ln1w=stack(lambda p: p["ln1_w"][None, :]),
        ln1b=stack(lambda p: p["ln1_b"][None, :]),
        lin1w=stack(lambda p: p["lin1_w"].T),      # (L, E, nhid)
        lin1b=stack(lambda p: p["lin1_b"][None, :]),
        lin2w=stack(lambda p: p["lin2_w"].T),      # (L, nhid, E)
        lin2b=stack(lambda p: p["lin2_b"][None, :]),
        ln2w=stack(lambda p: p["ln2_w"][None, :]),
        ln2b=stack(lambda p: p["ln2_b"][None, :]),
        dec_wT=jnp.zeros((E, Vp), jnp.float32).at[:, :V].set(dec_w.T),
        dec_b=jnp.zeros((1, Vp), jnp.float32).at[0, :V].set(dec_b),
    )
    return packed, Vp


# ----------------------------------------------------------------------------
# Forward pass: embedding/PE glue + one fused pallas_call
# ----------------------------------------------------------------------------
def transformer_forward(src, emb, packed, Vp, nhead, ntoken):
    """src: (S, N) int32 tokens -> logits (S, N, ntoken)."""
    S, N = src.shape
    E = emb.shape[1]
    L = packed["wqkv"].shape[0]
    nhid = packed["lin1w"].shape[2]

    # embedding gather + positional encoding (glue, outside the kernel)
    x = emb[src] * math.sqrt(E)                    # (S, N, E)
    x = x + positional_encoding(S, E)[:, None, :]
    # TODO(synk): dropout (p=0.1) omitted — eval/inference-mode semantics (identity).
    x2 = jnp.transpose(x, (1, 0, 2)).reshape(N * S, E).astype(jnp.float32)

    # precomputed additive causal mask (hoisted out of the kernel)
    idx = jnp.arange(S)
    mask = jnp.where(idx[None, :] > idx[:, None], -1e30, 0.0).astype(jnp.float32)

    per_layer3 = lambda shape: pl.BlockSpec((1,) + shape, lambda l: (l, 0, 0))
    const2 = lambda shape: pl.BlockSpec(shape, lambda l: (0, 0))

    kernel = functools.partial(_transformer_kernel, nhead=nhead)
    # NOTE: for realistic sizes, add a leading "parallel" row-tile grid axis
    # (megacore) and tile the decoder vocab axis; cast matmul inputs to bf16 on
    # v6e/v7x.  At these shapes everything fits VMEM and one sequential layer
    # grid minimizes launch + HBM-round-trip overhead.
    logits = pl.pallas_call(
        kernel,
        out_shape=jax.ShapeDtypeStruct((N * S, Vp), jnp.float32),
        grid=(L,),                                  # sequential over layers
        in_specs=[
            const2((N * S, E)),                     # x (fetched once)
            const2((S, S)),                         # causal mask
            per_layer3((E, 3 * E)), per_layer3((1, 3 * E)),
            per_layer3((E, E)), per_layer3((1, E)),
            per_layer3((1, E)), per_layer3((1, E)),
            per_layer3((E, nhid)), per_layer3((1, nhid)),
            per_layer3((nhid, E)), per_layer3((1, E)),
            per_layer3((1, E)), per_layer3((1, E)),
            const2((E, Vp)), const2((1, Vp)),       # decoder weight/bias (padded)
        ],
        out_specs=const2((N * S, Vp)),              # lane-dense, resident, written once
        scratch_shapes=[pltpu.VMEM((N * S, E), jnp.float32)],
        compiler_params=pltpu.CompilerParams(
            dimension_semantics=("arbitrary",)),
    )(x2, mask,
      packed["wqkv"], packed["bqkv"], packed["wo"], packed["bo"],
      packed["ln1w"], packed["ln1b"], packed["lin1w"], packed["lin1b"],
      packed["lin2w"], packed["lin2b"], packed["ln2w"], packed["ln2b"],
      packed["dec_wT"], packed["dec_b"])

    out = logits[:, :ntoken].reshape(N, S, ntoken)
    return jnp.transpose(out, (1, 0, 2))            # (S, N, ntoken)


# ----------------------------------------------------------------------------
if __name__ == "__main__":
    ntoken, embsize, nhead, nlayers, nhid = 50, 32, 2, 2, 64
    S, N = 8, 2

    key = jax.random.PRNGKey(0)
    pkey, skey = jax.random.split(key)
    emb, dec_w, dec_b, layers = init_params(pkey, ntoken, embsize, nlayers, nhid)
    packed, Vp = prepare_weights(dec_w, dec_b, layers)
    src = jax.random.randint(skey, (S, N), 0, ntoken, dtype=jnp.int32)

    out = transformer_forward(src, emb, packed, Vp, nhead, ntoken)
    out = jax.block_until_ready(out)
    assert out.shape == (S, N, ntoken), out.shape
    assert bool(jnp.all(jnp.isfinite(out)))
    print("KERNEL_OK")
</pallas_src>

<mosaic_0001>
module attributes {stable_mosaic.version = 11 : i64} {
  func.func @_transformer_kernel(%arg0: i32, %arg1: memref<16x32xf32, #tpu.memory_space<vmem>>, %arg2: memref<8x8xf32, #tpu.memory_space<vmem>>, %arg3: memref<1x32x96xf32, #tpu.memory_space<vmem>>, %arg4: memref<1x1x96xf32, #tpu.memory_space<vmem>>, %arg5: memref<1x32x32xf32, #tpu.memory_space<vmem>>, %arg6: memref<1x1x32xf32, #tpu.memory_space<vmem>>, %arg7: memref<1x1x32xf32, #tpu.memory_space<vmem>>, %arg8: memref<1x1x32xf32, #tpu.memory_space<vmem>>, %arg9: memref<1x32x64xf32, #tpu.memory_space<vmem>>, %arg10: memref<1x1x64xf32, #tpu.memory_space<vmem>>, %arg11: memref<1x64x32xf32, #tpu.memory_space<vmem>>, %arg12: memref<1x1x32xf32, #tpu.memory_space<vmem>>, %arg13: memref<1x1x32xf32, #tpu.memory_space<vmem>>, %arg14: memref<1x1x32xf32, #tpu.memory_space<vmem>>, %arg15: memref<32x128xf32, #tpu.memory_space<vmem>>, %arg16: memref<1x128xf32, #tpu.memory_space<vmem>>, %arg17: memref<16x128xf32, #tpu.memory_space<vmem>>, %arg18: memref<16x32xf32, #tpu.memory_space<vmem>>) attributes {dimension_semantics = [#tpu.dimension_semantics<arbitrary>], iteration_bounds = array<i64: 2>, scalar_prefetch = 0 : i64, scratch_operands = 1 : i64, tpu.core_type = #tpu.core_type<tc>, window_params = [{pipeline_mode = #tpu.pipeline_mode<synchronous>, transform_indices = @transform_0, window_bounds = array<i64: 16, 32>}, {pipeline_mode = #tpu.pipeline_mode<synchronous>, transform_indices = @transform_1, window_bounds = array<i64: 8, 8>}, {transform_indices = @transform_2, window_bounds = array<i64: 1, 32, 96>}, {transform_indices = @transform_3, window_bounds = array<i64: 1, 1, 96>}, {transform_indices = @transform_4, window_bounds = array<i64: 1, 32, 32>}, {transform_indices = @transform_5, window_bounds = array<i64: 1, 1, 32>}, {transform_indices = @transform_6, window_bounds = array<i64: 1, 1, 32>}, {transform_indices = @transform_7, window_bounds = array<i64: 1, 1, 32>}, {transform_indices = @transform_8, window_bounds = array<i64: 1, 32, 64>}, {transform_indices = @transform_9, window_bounds = array<i64: 1, 1, 64>}, {transform_indices = @transform_10, window_bounds = array<i64: 1, 64, 32>}, {transform_indices = @transform_11, window_bounds = array<i64: 1, 1, 32>}, {transform_indices = @transform_12, window_bounds = array<i64: 1, 1, 32>}, {transform_indices = @transform_13, window_bounds = array<i64: 1, 1, 32>}, {pipeline_mode = #tpu.pipeline_mode<synchronous>, transform_indices = @transform_14, window_bounds = array<i64: 32, 128>}, {pipeline_mode = #tpu.pipeline_mode<synchronous>, transform_indices = @transform_15, window_bounds = array<i64: 1, 128>}, {pipeline_mode = #tpu.pipeline_mode<synchronous>, transform_indices = @transform_16, window_bounds = array<i64: 16, 128>}]} {
    %c0_i32 = arith.constant 0 : i32
    %0 = arith.cmpi eq, %arg0, %c0_i32 : i32
    %1 = arith.extui %0 : i1 to i32
    %c0_i32_0 = arith.constant 0 : i32
    %2 = arith.cmpi ne, %1, %c0_i32_0 : i32
    scf.if %2 {
      %c0_67 = arith.constant 0 : index
      %c0_68 = arith.constant 0 : index
      %136 = vector.load %arg1[%c0_67, %c0_68] : memref<16x32xf32, #tpu.memory_space<vmem>>, vector<16x32xf32>
      %c0_69 = arith.constant 0 : index
      %c0_70 = arith.constant 0 : index
      %137 = vector.load %arg18[%c0_69, %c0_70] : memref<16x32xf32, #tpu.memory_space<vmem>>, vector<16x32xf32>
      tpu.vector_store %arg18[%c0_69, %c0_70], %136 {strides = array<i32>} : memref<16x32xf32, #tpu.memory_space<vmem>>, vector<16x32xf32>,
    } else {
    }
    %c0 = arith.constant 0 : index
    %c0_1 = arith.constant 0 : index
    %3 = vector.load %arg18[%c0, %c0_1] : memref<16x32xf32, #tpu.memory_space<vmem>>, vector<16x32xf32>
    %c0_2 = arith.constant 0 : index
    %c0_3 = arith.constant 0 : index
    %c0_4 = arith.constant 0 : index
    %4 = vector.load %arg3[%c0_2, %c0_3, %c0_4] : memref<1x32x96xf32, #tpu.memory_space<vmem>>, vector<1x32x96xf32>
    %5 = vector.shape_cast %4 : vector<1x32x96xf32> to vector<32x96xf32>
    %cst = arith.constant dense<0.000000e+00> : vector<16x96xf32>
    %6 = tpu.matmul %3, %5, %cst {dimension_numbers = #tpu.dot_dimension_numbers<[1], [0], [0], [1], [0, 0, 1, 1], [], []>} : vector<16x32xf32>, vector<32x96xf32>, vector<16x96xf32> -> vector<16x96xf32>
    %c0_5 = arith.constant 0 : index
    %c0_6 = arith.constant 0 : index
    %c0_7 = arith.constant 0 : index
    %7 = vector.load %arg4[%c0_5, %c0_6, %c0_7] : memref<1x1x96xf32, #tpu.memory_space<vmem>>, vector<1x1x96xf32>
    %8 = vector.shape_cast %7 : vector<1x1x96xf32> to vector<1x96xf32>
    %9 = vector.broadcast %8 : vector<1x96xf32> to vector<16x96xf32>
    %10 = arith.addf %6, %9 : vector<16x96xf32>
    %11 = vector.shape_cast %10 : vector<16x96xf32> to vector<2x8x96xf32>
    %c0_8 = arith.constant 0 : index
    %c0_9 = arith.constant 0 : index
    %12 = vector.load %arg2[%c0_8, %c0_9] : memref<8x8xf32, #tpu.memory_space<vmem>>, vector<8x8xf32>
    %13 = vector.extract_strided_slice %11 {offsets = [0, 0, 0], sizes = [2, 8, 16], strides = [1, 1, 1]} : vector<2x8x96xf32> to vector<2x8x16xf32>
    %cst_10 = arith.constant 2.500000e-01 : f32
    %14 = vector.broadcast %cst_10 : f32 to vector<2x8x16xf32>
    %15 = arith.mulf %13, %14 : vector<2x8x16xf32>
    %16 = vector.extract_strided_slice %11 {offsets = [0, 0, 32], sizes = [2, 8, 16], strides = [1, 1, 1]} : vector<2x8x96xf32> to vector<2x8x16xf32>
    %17 = vector.extract_strided_slice %11 {offsets = [0, 0, 64], sizes = [2, 8, 16], strides = [1, 1, 1]} : vector<2x8x96xf32> to vector<2x8x16xf32>
    "tpu.trace_start"() <{level = 10 : i32, message = "nqd,nkd->nqk"}> : () -> ()
    %cst_11 = arith.constant dense<0.000000e+00> : vector<2x8x8xf32>
    %18 = tpu.matmul %15, %16, %cst_11 {dimension_numbers = #tpu.dot_dimension_numbers<[2], [2], [1], [1], [0, 0, 0, 1, 1, 1], [0], [0]>} : vector<2x8x16xf32>, vector<2x8x16xf32>, vector<2x8x8xf32> -> vector<2x8x8xf32>
    "tpu.trace_stop"() : () -> ()
    %19 = vector.shape_cast %12 : vector<8x8xf32> to vector<1x8x8xf32>
    %20 = vector.broadcast %19 : vector<1x8x8xf32> to vector<2x8x8xf32>
    %21 = arith.addf %18, %20 : vector<2x8x8xf32>
    %cst_12 = arith.constant dense<0xFF800000> : vector<2x8xf32>
    %22 = vector.multi_reduction <maximumf>, %21, %cst_12 [2] : vector<2x8x8xf32> to vector<2x8xf32>
    %23 = vector.shape_cast %22 : vector<2x8xf32> to vector<2x8x1xf32>
    %24 = vector.broadcast %23 : vector<2x8x1xf32> to vector<2x8x8xf32>
    %25 = arith.subf %21, %24 : vector<2x8x8xf32>
    %26 = math.exp %25 : vector<2x8x8xf32>
    %cst_13 = arith.constant dense<0.000000e+00> : vector<2x8xf32>
    %27 = vector.multi_reduction <add>, %26, %cst_13 [2] : vector<2x8x8xf32> to vector<2x8xf32>
    %28 = vector.shape_cast %27 : vector<2x8xf32> to vector<2x8x1xf32>
    %29 = tpu.reciprocal %28 {approx = true} : vector<2x8x1xf32> -> vector<2x8x1xf32>
    %30 = vector.broadcast %29 : vector<2x8x1xf32> to vector<2x8x8xf32>
    %31 = arith.mulf %26, %30 : vector<2x8x8xf32>
    "tpu.trace_start"() <{level = 10 : i32, message = "nqk,nkd->nqd"}> : () -> ()
    %cst_14 = arith.constant dense<0.000000e+00> : vector<2x8x16xf32>
    %32 = tpu.matmul %31, %17, %cst_14 {dimension_numbers = #tpu.dot_dimension_numbers<[2], [1], [1], [2], [0, 0, 0, 1, 1, 2], [0], [0]>} : vector<2x8x8xf32>, vector<2x8x16xf32>, vector<2x8x16xf32> -> vector<2x8x16xf32>
    "tpu.trace_stop"() : () -> ()
    %33 = vector.extract_strided_slice %11 {offsets = [0, 0, 16], sizes = [2, 8, 16], strides = [1, 1, 1]} : vector<2x8x96xf32> to vector<2x8x16xf32>
    %cst_15 = arith.constant 2.500000e-01 : f32
    %34 = vector.broadcast %cst_15 : f32 to vector<2x8x16xf32>
    %35 = arith.mulf %33, %34 : vector<2x8x16xf32>
    %36 = vector.extract_strided_slice %11 {offsets = [0, 0, 48], sizes = [2, 8, 16], strides = [1, 1, 1]} : vector<2x8x96xf32> to vector<2x8x16xf32>
    %37 = vector.extract_strided_slice %11 {offsets = [0, 0, 80], sizes = [2, 8, 16], strides = [1, 1, 1]} : vector<2x8x96xf32> to vector<2x8x16xf32>
    "tpu.trace_start"() <{level = 10 : i32, message = "nqd,nkd->nqk"}> : () -> ()
    %cst_16 = arith.constant dense<0.000000e+00> : vector<2x8x8xf32>
    %38 = tpu.matmul %35, %36, %cst_16 {dimension_numbers = #tpu.dot_dimension_numbers<[2], [2], [1], [1], [0, 0, 0, 1, 1, 1], [0], [0]>} : vector<2x8x16xf32>, vector<2x8x16xf32>, vector<2x8x8xf32> -> vector<2x8x8xf32>
    "tpu.trace_stop"() : () -> ()
    %39 = vector.shape_cast %12 : vector<8x8xf32> to vector<1x8x8xf32>
    %40 = vector.broadcast %39 : vector<1x8x8xf32> to vector<2x8x8xf32>
    %41 = arith.addf %38, %40 : vector<2x8x8xf32>
    %cst_17 = arith.constant dense<0xFF800000> : vector<2x8xf32>
    %42 = vector.multi_reduction <maximumf>, %41, %cst_17 [2] : vector<2x8x8xf32> to vector<2x8xf32>
    %43 = vector.shape_cast %42 : vector<2x8xf32> to vector<2x8x1xf32>
    %44 = vector.broadcast %43 : vector<2x8x1xf32> to vector<2x8x8xf32>
    %45 = arith.subf %41, %44 : vector<2x8x8xf32>
    %46 = math.exp %45 : vector<2x8x8xf32>
    %cst_18 = arith.constant dense<0.000000e+00> : vector<2x8xf32>
    %47 = vector.multi_reduction <add>, %46, %cst_18 [2] : vector<2x8x8xf32> to vector<2x8xf32>
    %48 = vector.shape_cast %47 : vector<2x8xf32> to vector<2x8x1xf32>
    %49 = tpu.reciprocal %48 {approx = true} : vector<2x8x1xf32> -> vector<2x8x1xf32>
    %50 = vector.broadcast %49 : vector<2x8x1xf32> to vector<2x8x8xf32>
    %51 = arith.mulf %46, %50 : vector<2x8x8xf32>
    "tpu.trace_start"() <{level = 10 : i32, message = "nqk,nkd->nqd"}> : () -> ()
    %cst_19 = arith.constant dense<0.000000e+00> : vector<2x8x16xf32>
    %52 = tpu.matmul %51, %37, %cst_19 {dimension_numbers = #tpu.dot_dimension_numbers<[2], [1], [1], [2], [0, 0, 0, 1, 1, 2], [0], [0]>} : vector<2x8x8xf32>, vector<2x8x16xf32>, vector<2x8x16xf32> -> vector<2x8x16xf32>
    "tpu.trace_stop"() : () -> ()
    %53 = tpu.concatenate %32, %52 in 2 : vector<2x8x16xf32>, vector<2x8x16xf32> -> vector<2x8x32xf32>
    %54 = vector.shape_cast %53 : vector<2x8x32xf32> to vector<16x32xf32>
    %c0_20 = arith.constant 0 : index
    %c0_21 = arith.constant 0 : index
    %c0_22 = arith.constant 0 : index
    %55 = vector.load %arg5[%c0_20, %c0_21, %c0_22] : memref<1x32x32xf32, #tpu.memory_space<vmem>>, vector<1x32x32xf32>
    %56 = vector.shape_cast %55 : vector<1x32x32xf32> to vector<32x32xf32>
    %cst_23 = arith.constant dense<0.000000e+00> : vector<16x32xf32>
    %57 = tpu.matmul %54, %56, %cst_23 {dimension_numbers = #tpu.dot_dimension_numbers<[1], [0], [0], [1], [0, 0, 1, 1], [], []>} : vector<16x32xf32>, vector<32x32xf32>, vector<16x32xf32> -> vector<16x32xf32>
    %c0_24 = arith.constant 0 : index
    %c0_25 = arith.constant 0 : index
    %c0_26 = arith.constant 0 : index
    %58 = vector.load %arg6[%c0_24, %c0_25, %c0_26] : memref<1x1x32xf32, #tpu.memory_space<vmem>>, vector<1x1x32xf32>
    %59 = vector.shape_cast %58 : vector<1x1x32xf32> to vector<1x32xf32>
    %60 = vector.broadcast %59 : vector<1x32xf32> to vector<16x32xf32>
    %61 = arith.addf %57, %60 : vector<16x32xf32>
    %62 = arith.addf %3, %61 : vector<16x32xf32>
    %cst_27 = arith.constant dense<0.000000e+00> : vector<16xf32>
    %63 = vector.multi_reduction <add>, %62, %cst_27 [1] : vector<16x32xf32> to vector<16xf32>
    %64 = vector.shape_cast %63 : vector<16xf32> to vector<16x1xf32>
    %cst_28 = arith.constant 3.200000e+01 : f32
    %65 = vector.broadcast %cst_28 : f32 to vector<16x1xf32>
    %66 = arith.divf %64, %65 : vector<16x1xf32>
    %67 = vector.broadcast %66 : vector<16x1xf32> to vector<16x32xf32>
    %68 = arith.subf %62, %67 : vector<16x32xf32>
    %69 = arith.mulf %68, %68 : vector<16x32xf32>
    %cst_29 = arith.constant dense<0.000000e+00> : vector<16xf32>
    %70 = vector.multi_reduction <add>, %69, %cst_29 [1] : vector<16x32xf32> to vector<16xf32>
    %71 = vector.shape_cast %70 : vector<16xf32> to vector<16x1xf32>
    %cst_30 = arith.constant 3.200000e+01 : f32
    %72 = vector.broadcast %cst_30 : f32 to vector<16x1xf32>
    %73 = arith.divf %71, %72 : vector<16x1xf32>
    %74 = vector.broadcast %66 : vector<16x1xf32> to vector<16x32xf32>
    %75 = arith.subf %62, %74 : vector<16x32xf32>
    %cst_31 = arith.constant 9.99999974E-6 : f32
    %76 = vector.broadcast %cst_31 : f32 to vector<16x1xf32>
    %77 = arith.addf %73, %76 : vector<16x1xf32>
    %78 = math.rsqrt %77 : vector<16x1xf32>
    %79 = vector.broadcast %78 : vector<16x1xf32> to vector<16x32xf32>
    %80 = arith.mulf %75, %79 : vector<16x32xf32>
    %c0_32 = arith.constant 0 : index
    %c0_33 = arith.constant 0 : index
    %c0_34 = arith.constant 0 : index
    %81 = vector.load %arg7[%c0_32, %c0_33, %c0_34] : memref<1x1x32xf32, #tpu.memory_space<vmem>>, vector<1x1x32xf32>
    %82 = vector.shape_cast %81 : vector<1x1x32xf32> to vector<1x32xf32>
    %83 = vector.broadcast %82 : vector<1x32xf32> to vector<16x32xf32>
    %84 = arith.mulf %80, %83 : vector<16x32xf32>
    %c0_35 = arith.constant 0 : index
    %c0_36 = arith.constant 0 : index
    %c0_37 = arith.constant 0 : index
    %85 = vector.load %arg8[%c0_35, %c0_36, %c0_37] : memref<1x1x32xf32, #tpu.memory_space<vmem>>, vector<1x1x32xf32>
    %86 = vector.shape_cast %85 : vector<1x1x32xf32> to vector<1x32xf32>
    %87 = vector.broadcast %86 : vector<1x32xf32> to vector<16x32xf32>
    %88 = arith.addf %84, %87 : vector<16x32xf32>
    %c0_38 = arith.constant 0 : index
    %c0_39 = arith.constant 0 : index
    %c0_40 = arith.constant 0 : index
    %89 = vector.load %arg9[%c0_38, %c0_39, %c0_40] : memref<1x32x64xf32, #tpu.memory_space<vmem>>, vector<1x32x64xf32>
    %90 = vector.shape_cast %89 : vector<1x32x64xf32> to vector<32x64xf32>
    %cst_41 = arith.constant dense<0.000000e+00> : vector<16x64xf32>
    %91 = tpu.matmul %88, %90, %cst_41 {dimension_numbers = #tpu.dot_dimension_numbers<[1], [0], [0], [1], [0, 0, 1, 1], [], []>} : vector<16x32xf32>, vector<32x64xf32>, vector<16x64xf32> -> vector<16x64xf32>
    %c0_42 = arith.constant 0 : index
    %c0_43 = arith.constant 0 : index
    %c0_44 = arith.constant 0 : index
    %92 = vector.load %arg10[%c0_42, %c0_43, %c0_44] : memref<1x1x64xf32, #tpu.memory_space<vmem>>, vector<1x1x64xf32>
    %93 = vector.shape_cast %92 : vector<1x1x64xf32> to vector<1x64xf32>
    %94 = vector.broadcast %93 : vector<1x64xf32> to vector<16x64xf32>
    %95 = arith.addf %91, %94 : vector<16x64xf32>
    %cst_45 = arith.constant 0.000000e+00 : f32
    %96 = vector.broadcast %cst_45 : f32 to vector<16x64xf32>
    %97 = arith.maximumf %95, %96 : vector<16x64xf32>
    %c0_46 = arith.constant 0 : index
    %c0_47 = arith.constant 0 : index
    %c0_48 = arith.constant 0 : index
    %98 = vector.load %arg11[%c0_46, %c0_47, %c0_48] : memref<1x64x32xf32, #tpu.memory_space<vmem>>, vector<1x64x32xf32>
    %99 = vector.shape_cast %98 : vector<1x64x32xf32> to vector<64x32xf32>
    %cst_49 = arith.constant dense<0.000000e+00> : vector<16x32xf32>
    %100 = tpu.matmul %97, %99, %cst_49 {dimension_numbers = #tpu.dot_dimension_numbers<[1], [0], [0], [1], [0, 0, 1, 1], [], []>} : vector<16x64xf32>, vector<64x32xf32>, vector<16x32xf32> -> vector<16x32xf32>
    %c0_50 = arith.constant 0 : index
    %c0_51 = arith.constant 0 : index
    %c0_52 = arith.constant 0 : index
    %101 = vector.load %arg12[%c0_50, %c0_51, %c0_52] : memref<1x1x32xf32, #tpu.memory_space<vmem>>, vector<1x1x32xf32>
    %102 = vector.shape_cast %101 : vector<1x1x32xf32> to vector<1x32xf32>
    %103 = vector.broadcast %102 : vector<1x32xf32> to vector<16x32xf32>
    %104 = arith.addf %100, %103 : vector<16x32xf32>
    %105 = arith.addf %88, %104 : vector<16x32xf32>
    %cst_53 = arith.constant dense<0.000000e+00> : vector<16xf32>
    %106 = vector.multi_reduction <add>, %105, %cst_53 [1] : vector<16x32xf32> to vector<16xf32>
    %107 = vector.shape_cast %106 : vector<16xf32> to vector<16x1xf32>
    %cst_54 = arith.constant 3.200000e+01 : f32
    %108 = vector.broadcast %cst_54 : f32 to vector<16x1xf32>
    %109 = arith.divf %107, %108 : vector<16x1xf32>
    %110 = vector.broadcast %109 : vector<16x1xf32> to vector<16x32xf32>
    %111 = arith.subf %105, %110 : vector<16x32xf32>
    %112 = arith.mulf %111, %111 : vector<16x32xf32>
    %cst_55 = arith.constant dense<0.000000e+00> : vector<16xf32>
    %113 = vector.multi_reduction <add>, %112, %cst_55 [1] : vector<16x32xf32> to vector<16xf32>
    %114 = vector.shape_cast %113 : vector<16xf32> to vector<16x1xf32>
    %cst_56 = arith.constant 3.200000e+01 : f32
    %115 = vector.broadcast %cst_56 : f32 to vector<16x1xf32>
    %116 = arith.divf %114, %115 : vector<16x1xf32>
    %117 = vector.broadcast %109 : vector<16x1xf32> to vector<16x32xf32>
    %118 = arith.subf %105, %117 : vector<16x32xf32>
    %cst_57 = arith.constant 9.99999974E-6 : f32
    %119 = vector.broadcast %cst_57 : f32 to vector<16x1xf32>
    %120 = arith.addf %116, %119 : vector<16x1xf32>
    %121 = math.rsqrt %120 : vector<16x1xf32>
    %122 = vector.broadcast %121 : vector<16x1xf32> to vector<16x32xf32>
    %123 = arith.mulf %118, %122 : vector<16x32xf32>
    %c0_58 = arith.constant 0 : index
    %c0_59 = arith.constant 0 : index
    %c0_60 = arith.constant 0 : index
    %124 = vector.load %arg13[%c0_58, %c0_59, %c0_60] : memref<1x1x32xf32, #tpu.memory_space<vmem>>, vector<1x1x32xf32>
    %125 = vector.shape_cast %124 : vector<1x1x32xf32> to vector<1x32xf32>
    %126 = vector.broadcast %125 : vector<1x32xf32> to vector<16x32xf32>
    %127 = arith.mulf %123, %126 : vector<16x32xf32>
    %c0_61 = arith.constant 0 : index
    %c0_62 = arith.constant 0 : index
    %c0_63 = arith.constant 0 : index
    %128 = vector.load %arg14[%c0_61, %c0_62, %c0_63] : memref<1x1x32xf32, #tpu.memory_space<vmem>>, vector<1x1x32xf32>
    %129 = vector.shape_cast %128 : vector<1x1x32xf32> to vector<1x32xf32>
    %130 = vector.broadcast %129 : vector<1x32xf32> to vector<16x32xf32>
    %131 = arith.addf %127, %130 : vector<16x32xf32>
    %c0_64 = arith.constant 0 : index
    %c0_65 = arith.constant 0 : index
    %132 = vector.load %arg18[%c0_64, %c0_65] : memref<16x32xf32, #tpu.memory_space<vmem>>, vector<16x32xf32>
    tpu.vector_store %arg18[%c0_64, %c0_65], %131 {strides = array<i32>} : memref<16x32xf32, #tpu.memory_space<vmem>>, vector<16x32xf32>,
    %c1_i32 = arith.constant 1 : i32
    %133 = arith.cmpi eq, %arg0, %c1_i32 : i32
    %134 = arith.extui %133 : i1 to i32
    %c0_i32_66 = arith.constant 0 : i32
    %135 = arith.cmpi ne, %134, %c0_i32_66 : i32
    scf.if %135 {
      %c0_67 = arith.constant 0 : index
      %c0_68 = arith.constant 0 : index
      %136 = vector.load %arg15[%c0_67, %c0_68] : memref<32x128xf32, #tpu.memory_space<vmem>>, vector<32x128xf32>
      %cst_69 = arith.constant dense<0.000000e+00> : vector<16x128xf32>
      %137 = tpu.matmul %131, %136, %cst_69 {dimension_numbers = #tpu.dot_dimension_numbers<[1], [0], [0], [1], [0, 0, 1, 1], [], []>} : vector<16x32xf32>, vector<32x128xf32>, vector<16x128xf32> -> vector<16x128xf32>
      %c0_70 = arith.constant 0 : index
      %c0_71 = arith.constant 0 : index
      %138 = vector.load %arg16[%c0_70, %c0_71] : memref<1x128xf32, #tpu.memory_space<vmem>>, vector<1x128xf32>
      %139 = vector.broadcast %138 : vector<1x128xf32> to vector<16x128xf32>
      %140 = arith.addf %137, %139 : vector<16x128xf32>
      %c0_72 = arith.constant 0 : index
      %c0_73 = arith.constant 0 : index
      %141 = vector.load %arg17[%c0_72, %c0_73] : memref<16x128xf32, #tpu.memory_space<vmem>>, vector<16x128xf32>
      tpu.vector_store %arg17[%c0_72, %c0_73], %140 {strides = array<i32>} : memref<16x128xf32, #tpu.memory_space<vmem>>, vector<16x128xf32>,
    } else {
    }
    return
  }
  func.func @transform_0(%arg0: i32) -> (i32, i32) {
    %c0_i32 = arith.constant 0 : i32
    %c0_i32_0 = arith.constant 0 : i32
    %c0_i32_1 = arith.constant 0 : i32
    return %c0_i32, %c0_i32_0 : i32, i32
  }
  func.func @transform_1(%arg0: i32) -> (i32, i32) {
    %c0_i32 = arith.constant 0 : i32
    %c0_i32_0 = arith.constant 0 : i32
    %c0_i32_1 = arith.constant 0 : i32
    return %c0_i32, %c0_i32_0 : i32, i32
  }
  func.func @transform_2(%arg0: i32) -> (i32, i32, i32) {
    %c0_i32 = arith.constant 0 : i32
    %c0_i32_0 = arith.constant 0 : i32
    %c0_i32_1 = arith.constant 0 : i32
    return %arg0, %c0_i32, %c0_i32_0 : i32, i32, i32
  }
  func.func @transform_3(%arg0: i32) -> (i32, i32, i32) {
    %c0_i32 = arith.constant 0 : i32
    %c0_i32_0 = arith.constant 0 : i32
    %c0_i32_1 = arith.constant 0 : i32
    return %arg0, %c0_i32, %c0_i32_0 : i32, i32, i32
  }
  func.func @transform_4(%arg0: i32) -> (i32, i32, i32) {
    %c0_i32 = arith.constant 0 : i32
    %c0_i32_0 = arith.constant 0 : i32
    %c0_i32_1 = arith.constant 0 : i32
    return %arg0, %c0_i32, %c0_i32_0 : i32, i32, i32
  }
  func.func @transform_5(%arg0: i32) -> (i32, i32, i32) {
    %c0_i32 = arith.constant 0 : i32
    %c0_i32_0 = arith.constant 0 : i32
    %c0_i32_1 = arith.constant 0 : i32
    return %arg0, %c0_i32, %c0_i32_0 : i32, i32, i32
  }
  func.func @transform_6(%arg0: i32) -> (i32, i32, i32) {
    %c0_i32 = arith.constant 0 : i32
    %c0_i32_0 = arith.constant 0 : i32
    %c0_i32_1 = arith.constant 0 : i32
    return %arg0, %c0_i32, %c0_i32_0 : i32, i32, i32
  }
  func.func @transform_7(%arg0: i32) -> (i32, i32, i32) {
    %c0_i32 = arith.constant 0 : i32
    %c0_i32_0 = arith.constant 0 : i32
    %c0_i32_1 = arith.constant 0 : i32
    return %arg0, %c0_i32, %c0_i32_0 : i32, i32, i32
  }
  func.func @transform_8(%arg0: i32) -> (i32, i32, i32) {
    %c0_i32 = arith.constant 0 : i32
    %c0_i32_0 = arith.constant 0 : i32
    %c0_i32_1 = arith.constant 0 : i32
    return %arg0, %c0_i32, %c0_i32_0 : i32, i32, i32
  }
  func.func @transform_9(%arg0: i32) -> (i32, i32, i32) {
    %c0_i32 = arith.constant 0 : i32
    %c0_i32_0 = arith.constant 0 : i32
    %c0_i32_1 = arith.constant 0 : i32
    return %arg0, %c0_i32, %c0_i32_0 : i32, i32, i32
  }
  func.func @transform_10(%arg0: i32) -> (i32, i32, i32) {
    %c0_i32 = arith.constant 0 : i32
    %c0_i32_0 = arith.constant 0 : i32
    %c0_i32_1 = arith.constant 0 : i32
    return %arg0, %c0_i32, %c0_i32_0 : i32, i32, i32
  }
  func.func @transform_11(%arg0: i32) -> (i32, i32, i32) {
    %c0_i32 = arith.constant 0 : i32
    %c0_i32_0 = arith.constant 0 : i32
    %c0_i32_1 = arith.constant 0 : i32
    return %arg0, %c0_i32, %c0_i32_0 : i32, i32, i32
  }
  func.func @transform_12(%arg0: i32) -> (i32, i32, i32) {
    %c0_i32 = arith.constant 0 : i32
    %c0_i32_0 = arith.constant 0 : i32
    %c0_i32_1 = arith.constant 0 : i32
    return %arg0, %c0_i32, %c0_i32_0 : i32, i32, i32
  }
  func.func @transform_13(%arg0: i32) -> (i32, i32, i32) {
    %c0_i32 = arith.constant 0 : i32
    %c0_i32_0 = arith.constant 0 : i32
    %c0_i32_1 = arith.constant 0 : i32
    return %arg0, %c0_i32, %c0_i32_0 : i32, i32, i32
  }
  func.func @transform_14(%arg0: i32) -> (i32, i32) {
    %c0_i32 = arith.constant 0 : i32
    %c0_i32_0 = arith.constant 0 : i32
    %c0_i32_1 = arith.constant 0 : i32
    return %c0_i32, %c0_i32_0 : i32, i32
  }
  func.func @transform_15(%arg0: i32) -> (i32, i32) {
    %c0_i32 = arith.constant 0 : i32
    %c0_i32_0 = arith.constant 0 : i32
    %c0_i32_1 = arith.constant 0 : i32
    return %c0_i32, %c0_i32_0 : i32, i32
  }
  func.func @transform_16(%arg0: i32) -> (i32, i32) {
    %c0_i32 = arith.constant 0 : i32
    %c0_i32_0 = arith.constant 0 : i32
    %c0_i32_1 = arith.constant 0 : i32
    return %c0_i32, %c0_i32_0 : i32, i32
  }
}

</mosaic_0001>

<llo_original>
// kernel: tpu_custom_call.1
$region0: #{tpu_custom_call.1}
  #allocation0 [shape = 'u32[]', space=smem, size = 0x4, offset = 0x4, fixed_abs, tag = 'smem constant byte address 0x4 - core index']
  #allocation1 [shape = 'u32[72,128]{1,0:T(1,128)}', space=vmem, size = 0x9000, scoped, tag = 'internal scratch']
  #allocation2 [shape = 'f32[16,32]{1,0:T(8,128)}', space=vmem, size = 0x2000, scoped, tag = 'scratch operand']
  %s0 = inlined_call_operand.hbm [shape: f32[16,32], index: 0, kind: input, shape index: {}]
  %s1 = inlined_call_operand.hbm [shape: f32[8,8], index: 1, kind: input, shape index: {}]
  %s2 = inlined_call_operand.vmem [shape: f32[2,32,96], index: 2, kind: input, shape index: {}]
  %s3 = inlined_call_operand.vmem [shape: f32[2,1,96], index: 3, kind: input, shape index: {}]
  %s4 = inlined_call_operand.vmem [shape: f32[2,32,32], index: 4, kind: input, shape index: {}]
  %s5 = inlined_call_operand.hbm [shape: f32[2,1,32], index: 5, kind: input, shape index: {}]
  %s6 = inlined_call_operand.vmem [shape: f32[2,1,32], index: 6, kind: input, shape index: {}]
  %s7 = inlined_call_operand.hbm [shape: f32[2,1,32], index: 7, kind: input, shape index: {}]
  %s8 = inlined_call_operand.vmem [shape: f32[2,32,64], index: 8, kind: input, shape index: {}]
  %s9 = inlined_call_operand.vmem [shape: f32[2,1,64], index: 9, kind: input, shape index: {}]
  %s10 = inlined_call_operand.vmem [shape: f32[2,64,32], index: 10, kind: input, shape index: {}]
  %s11 = inlined_call_operand.vmem [shape: f32[2,1,32], index: 11, kind: input, shape index: {}]
  %s12 = inlined_call_operand.vmem [shape: f32[2,1,32], index: 12, kind: input, shape index: {}]
  %s13 = inlined_call_operand.hbm [shape: f32[2,1,32], index: 13, kind: input, shape index: {}]
  %s14 = inlined_call_operand.hbm [shape: f32[32,128], index: 14, kind: input, shape index: {}]
  %s15 = inlined_call_operand.vmem [shape: f32[1,128], index: 15, kind: input, shape index: {}]
  %s16 = inlined_call_operand.hbm [shape: f32[16,128], index: 16, kind: output, shape index: {}]
  %s17 = sld [smem:[#allocation0]]
  $region129: #{tpu_custom_call.1} parent=0
    _
  %s19 = ssub.s32 1, %s17
  %s20 = scalar_select 0, %s19, %s17
  $region1: #{tpu_custom_call.1} parent=0
    #allocation3 [shape = 'u8[8192]{0}', space=vmem, size = 0x2000, scoped, tag = 'input window, operand 0, single buffered']
    #allocation4 [shape = 's32[2]{0}', space=sflag, size = 0x8, scoped, tag = 'scoped memory for tpu_custom_call.1']
    #allocation5 [shape = 's32[2]{0}', space=sflag, size = 0x8, scoped, tag = 'scoped memory for tpu_custom_call.1']
    #allocation6 [shape = 'u8[4096]{0}', space=vmem, size = 0x1000, scoped, tag = 'input window, operand 1, single buffered']
    #allocation7 [shape = 's32[1]{0}', space=sflag, size = 0x4, scoped, tag = 'scoped memory for tpu_custom_call.1']
    #allocation8 [shape = 'u8[1024]{0}', space=vmem, size = 0x400, scoped, tag = 'input window, operand 5']
    #allocation9 [shape = 'u8[1024]{0}', space=vmem, size = 0x400, scoped, tag = 'input window, operand 7']
    #allocation10 [shape = 'u8[1024]{0}', space=vmem, size = 0x400, scoped, tag = 'input window, operand 13']
    #allocation11 [shape = 'u8[16384]{0}', space=vmem, size = 0x4000, scoped, tag = 'input window, operand 14, single buffered']
    #allocation12 [shape = 'u8[8192]{0}', space=vmem, size = 0x2000, scoped, tag = 'output window, operand 0, single buffered']
    %21 = vsyncpa [#allocation4], 0
    %22 = vsyncpa [#allocation7], 0
    %23 = vsyncpa [#allocation5], 0
    loop: start=0, step=1, limit=4
    $region2: #{tpu_custom_call.1} parent=1 // loop_pre_header
      _
    $region3: #{tpu_custom_call.1} parent=1 // loop_header
      %s25 = sphi 0, %s29
      %p26 = scmp.ge.s32.totalorder %s25, 4
      %s33 = sphi 0, %s33
      %s35 = sphi 0, %s33
      %s36 = sphi 0, %s35
      %s50 = sphi 0, %s36
      %s54 = sphi 0, %s54
      %s56 = sphi 0, %s54
      %s57 = sphi 0, %s56
      %s71 = sphi 0, %s57
      %s77 = sphi 0, %s79
      %s80 = sphi 0, %s77
      %s81 = sphi 0, %s80
      %s97 = sphi 0, %s81
      %s103 = sphi 0, %s105
      %s106 = sphi 0, %s103
      %s107 = sphi 0, %s106
      %s123 = sphi 0, %s107
      %s129 = sphi 0, %s131
      %s132 = sphi 0, %s129
      %s133 = sphi 0, %s132
      %s149 = sphi 0, %s133
      %s155 = sphi 0, %s157
      %s158 = sphi 0, %s155
      %s159 = sphi 0, %s158
      %s175 = sphi 0, %s159
      %s181 = sphi 0, %s183
      %s184 = sphi 0, %s181
      %s185 = sphi 0, %s184
      %s201 = sphi 0, %s185
      %s207 = sphi 0, %s209
      %s210 = sphi 0, %s207
      %s211 = sphi 0, %s210
      %s227 = sphi 0, %s211
      %s233 = sphi 0, %s235
      %s236 = sphi 0, %s233
      %s237 = sphi 0, %s236
      %s253 = sphi 0, %s237
      %s259 = sphi 0, %s261
      %s262 = sphi 0, %s259
      %s263 = sphi 0, %s262
      %s279 = sphi 0, %s263
      %s285 = sphi 0, %s287
      %s288 = sphi 0, %s285
      %s289 = sphi 0, %s288
      %s305 = sphi 0, %s289
      %s311 = sphi 0, %s313
      %s314 = sphi 0, %s311
      %s315 = sphi 0, %s314
      %s331 = sphi 0, %s315
      %s337 = sphi 0, %s339
      %s340 = sphi 0, %s337
      %s341 = sphi 0, %s340
      %s357 = sphi 0, %s341
      %s363 = sphi 0, %s365
      %s366 = sphi 0, %s363
      %s367 = sphi 0, %s366
      %s383 = sphi 0, %s367
      %s387 = sphi 0, %s387
      %s389 = sphi 0, %s387
      %s390 = sphi 0, %s389
      %s404 = sphi 0, %s390
      %s408 = sphi 0, %s408
      %s410 = sphi 0, %s408
      %s411 = sphi 0, %s410
      %s425 = sphi 0, %s411
      %s429 = sphi 0, %s429
      %s431 = sphi 0, %s429
      %s432 = sphi 0, %s431
      %s446 = sphi 0, %s432
    $region4: #{tpu_custom_call.1} parent=1 // loop_header_branch
      %28 = sbr.rel (%p26) target = $region8
    $region5: #{tpu_custom_call.1} parent=1 // loop_body
      %s30 = ssub.s32 %s25, 1
      %s31 = ssub.s32 %s25, 2
      %s32 = sadd.s32 %s25, 1
      %s34 = sadd.s32 %s33, 1
      %p37 = scmp.eq.s32.totalorder %s25, 1
      %p38 = scmp.ne.s32.totalorder %s33, %s35
      %p39 = scmp.eq.s32.totalorder %s25, 0
      %p40 = por %p38, %p39
      %p41 = scmp.ne.s32.totalorder %s33, %s35
      %p42 = scmp.eq.s32.totalorder %s30, 1
      %p43 = por %p41, %p42
      %p44 = scmp.ne.s32.totalorder %s35, %s36
      %p45 = scmp.eq.s32.totalorder %s30, 0
      %p46 = por %p44, %p45
      %p47 = scmp.ne.s32.totalorder %s35, %s36
      %p48 = scmp.eq.s32.totalorder %s31, 1
      %p49 = por %p47, %p48
      %p51 = scmp.ne.s32.totalorder %s36, %s50
      %p52 = scmp.eq.s32.totalorder %s31, 0
      %p53 = por %p51, %p52
      %s55 = sadd.s32 %s54, 1
      %p58 = scmp.eq.s32.totalorder %s25, 1
      %p59 = scmp.ne.s32.totalorder %s54, %s56
      %p60 = scmp.eq.s32.totalorder %s25, 0
      %p61 = por %p59, %p60
      %p62 = scmp.ne.s32.totalorder %s54, %s56
      %p63 = scmp.eq.s32.totalorder %s30, 1
      %p64 = por %p62, %p63
      %p65 = scmp.ne.s32.totalorder %s56, %s57
      %p66 = scmp.eq.s32.totalorder %s30, 0
      %p67 = por %p65, %p66
      %p68 = scmp.ne.s32.totalorder %s56, %s57
      %p69 = scmp.eq.s32.totalorder %s31, 1
      %p70 = por %p68, %p69
      %p72 = scmp.ne.s32.totalorder %s57, %s71
      %p73 = scmp.eq.s32.totalorder %s31, 0
      %p74 = por %p72, %p73
      %s75 = ssub.s32 %s25, %s32
      %p76 = scmp.eq.s32.totalorder %s75, 0
      %s78 = sadd.s32 %s77, 1
      %s79 = scalar_select %p76, %s77, %s78
      %p82 = pneg %p76
      %p83 = scmp.eq.s32.totalorder %s25, 1
      %p84 = por %p82, %p83
      %p85 = scmp.ne.s32.totalorder %s77, %s80
      %p86 = scmp.eq.s32.totalorder %s25, 0
      %p87 = por %p85, %p86
      %p88 = scmp.ne.s32.totalorder %s77, %s80
      %p89 = scmp.eq.s32.totalorder %s30, 1
      %p90 = por %p88, %p89
      %p91 = scmp.ne.s32.totalorder %s80, %s81
      %p92 = scmp.eq.s32.totalorder %s30, 0
      %p93 = por %p91, %p92
      %p94 = scmp.ne.s32.totalorder %s80, %s81
      %p95 = scmp.eq.s32.totalorder %s31, 1
      %p96 = por %p94, %p95
      %p98 = scmp.ne.s32.totalorder %s81, %s97
      %p99 = scmp.eq.s32.totalorder %s31, 0
      %p100 = por %p98, %p99
      %s101 = ssub.s32 %s25, %s32
      %p102 = scmp.eq.s32.totalorder %s101, 0
      %s104 = sadd.s32 %s103, 1
      %s105 = scalar_select %p102, %s103, %s104
      %p108 = pneg %p102
      %p109 = scmp.eq.s32.totalorder %s25, 1
      %p110 = por %p108, %p109
      %p111 = scmp.ne.s32.totalorder %s103, %s106
      %p112 = scmp.eq.s32.totalorder %s25, 0
      %p113 = por %p111, %p112
      %p114 = scmp.ne.s32.totalorder %s103, %s106
      %p115 = scmp.eq.s32.totalorder %s30, 1
      %p116 = por %p114, %p115
      %p117 = scmp.ne.s32.totalorder %s106, %s107
      %p118 = scmp.eq.s32.totalorder %s30, 0
      %p119 = por %p117, %p118
      %p120 = scmp.ne.s32.totalorder %s106, %s107
      %p121 = scmp.eq.s32.totalorder %s31, 1
      %p122 = por %p120, %p121
      %p124 = scmp.ne.s32.totalorder %s107, %s123
      %p125 = scmp.eq.s32.totalorder %s31, 0
      %p126 = por %p124, %p125
      %s127 = ssub.s32 %s25, %s32
      %p128 = scmp.eq.s32.totalorder %s127, 0
      %s130 = sadd.s32 %s129, 1
      %s131 = scalar_select %p128, %s129, %s130
      %p134 = pneg %p128
      %p135 = scmp.eq.s32.totalorder %s25, 1
      %p136 = por %p134, %p135
      %p137 = scmp.ne.s32.totalorder %s129, %s132
      %p138 = scmp.eq.s32.totalorder %s25, 0
      %p139 = por %p137, %p138
      %p140 = scmp.ne.s32.totalorder %s129, %s132
      %p141 = scmp.eq.s32.totalorder %s30, 1
      %p142 = por %p140, %p141
      %p143 = scmp.ne.s32.totalorder %s132, %s133
      %p144 = scmp.eq.s32.totalorder %s30, 0
      %p145 = por %p143, %p144
      %p146 = scmp.ne.s32.totalorder %s132, %s133
      %p147 = scmp.eq.s32.totalorder %s31, 1
      %p148 = por %p146, %p147
      %p150 = scmp.ne.s32.totalorder %s133, %s149
      %p151 = scmp.eq.s32.totalorder %s31, 0
      %p152 = por %p150, %p151
      %s153 = ssub.s32 %s25, %s32
      %p154 = scmp.eq.s32.totalorder %s153, 0
      %s156 = sadd.s32 %s155, 1
      %s157 = scalar_select %p154, %s155, %s156
      %p160 = pneg %p154
      %p161 = scmp.eq.s32.totalorder %s25, 1
      %p162 = por %p160, %p161
      %p163 = scmp.ne.s32.totalorder %s155, %s158
      %p164 = scmp.eq.s32.totalorder %s25, 0
      %p165 = por %p163, %p164
      %p166 = scmp.ne.s32.totalorder %s155, %s158
      %p167 = scmp.eq.s32.totalorder %s30, 1
      %p168 = por %p166, %p167
      %p169 = scmp.ne.s32.totalorder %s158, %s159
      %p170 = scmp.eq.s32.totalorder %s30, 0
      %p171 = por %p169, %p170
      %p172 = scmp.ne.s32.totalorder %s158, %s159
      %p173 = scmp.eq.s32.totalorder %s31, 1
      %p174 = por %p172, %p173
      %p176 = scmp.ne.s32.totalorder %s159, %s175
      %p177 = scmp.eq.s32.totalorder %s31, 0
      %p178 = por %p176, %p177
      %s179 = ssub.s32 %s25, %s32
      %p180 = scmp.eq.s32.totalorder %s179, 0
      %s182 = sadd.s32 %s181, 1
      %s183 = scalar_select %p180, %s181, %s182
      %p186 = pneg %p180
      %p187 = scmp.eq.s32.totalorder %s25, 1
      %p188 = por %p186, %p187
      %p189 = scmp.ne.s32.totalorder %s181, %s184
      %p190 = scmp.eq.s32.totalorder %s25, 0
      %p191 = por %p189, %p190
      %p192 = scmp.ne.s32.totalorder %s181, %s184
      %p193 = scmp.eq.s32.totalorder %s30, 1
      %p194 = por %p192, %p193
      %p195 = scmp.ne.s32.totalorder %s184, %s185
      %p196 = scmp.eq.s32.totalorder %s30, 0
      %p197 = por %p195, %p196
      %p198 = scmp.ne.s32.totalorder %s184, %s185
      %p199 = scmp.eq.s32.totalorder %s31, 1
      %p200 = por %p198, %p199
      %p202 = scmp.ne.s32.totalorder %s185, %s201
      %p203 = scmp.eq.s32.totalorder %s31, 0
      %p204 = por %p202, %p203
      %s205 = ssub.s32 %s25, %s32
      %p206 = scmp.eq.s32.totalorder %s205, 0
      %s208 = sadd.s32 %s207, 1
      %s209 = scalar_select %p206, %s207, %s208
      %p212 = pneg %p206
      %p213 = scmp.eq.s32.totalorder %s25, 1
      %p214 = por %p212, %p213
      %p215 = scmp.ne.s32.totalorder %s207, %s210
      %p216 = scmp.eq.s32.totalorder %s25, 0
      %p217 = por %p215, %p216
      %p218 = scmp.ne.s32.totalorder %s207, %s210
      %p219 = scmp.eq.s32.totalorder %s30, 1
      %p220 = por %p218, %p219
      %p221 = scmp.ne.s32.totalorder %s210, %s211
      %p222 = scmp.eq.s32.totalorder %s30, 0
      %p223 = por %p221, %p222
      %p224 = scmp.ne.s32.totalorder %s210, %s211
      %p225 = scmp.eq.s32.totalorder %s31, 1
      %p226 = por %p224, %p225
      %p228 = scmp.ne.s32.totalorder %s211, %s227
      %p229 = scmp.eq.s32.totalorder %s31, 0
      %p230 = por %p228, %p229
      %s231 = ssub.s32 %s25, %s32
      %p232 = scmp.eq.s32.totalorder %s231, 0
      %s234 = sadd.s32 %s233, 1
      %s235 = scalar_select %p232, %s233, %s234
      %p238 = pneg %p232
      %p239 = scmp.eq.s32.totalorder %s25, 1
      %p240 = por %p238, %p239
      %p241 = scmp.ne.s32.totalorder %s233, %s236
      %p242 = scmp.eq.s32.totalorder %s25, 0
      %p243 = por %p241, %p242
      %p244 = scmp.ne.s32.totalorder %s233, %s236
      %p245 = scmp.eq.s32.totalorder %s30, 1
      %p246 = por %p244, %p245
      %p247 = scmp.ne.s32.totalorder %s236, %s237
      %p248 = scmp.eq.s32.totalorder %s30, 0
      %p249 = por %p247, %p248
      %p250 = scmp.ne.s32.totalorder %s236, %s237
      %p251 = scmp.eq.s32.totalorder %s31, 1
      %p252 = por %p250, %p251
      %p254 = scmp.ne.s32.totalorder %s237, %s253
      %p255 = scmp.eq.s32.totalorder %s31, 0
      %p256 = por %p254, %p255
      %s257 = ssub.s32 %s25, %s32
      %p258 = scmp.eq.s32.totalorder %s257, 0
      %s260 = sadd.s32 %s259, 1
      %s261 = scalar_select %p258, %s259, %s260
      %p264 = pneg %p258
      %p265 = scmp.eq.s32.totalorder %s25, 1
      %p266 = por %p264, %p265
      %p267 = scmp.ne.s32.totalorder %s259, %s262
      %p268 = scmp.eq.s32.totalorder %s25, 0
      %p269 = por %p267, %p268
      %p270 = scmp.ne.s32.totalorder %s259, %s262
      %p271 = scmp.eq.s32.totalorder %s30, 1
      %p272 = por %p270, %p271
      %p273 = scmp.ne.s32.totalorder %s262, %s263
      %p274 = scmp.eq.s32.totalorder %s30, 0
      %p275 = por %p273, %p274
      %p276 = scmp.ne.s32.totalorder %s262, %s263
      %p277 = scmp.eq.s32.totalorder %s31, 1
      %p278 = por %p276, %p277
      %p280 = scmp.ne.s32.totalorder %s263, %s279
      %p281 = scmp.eq.s32.totalorder %s31, 0
      %p282 = por %p280, %p281
      %s283 = ssub.s32 %s25, %s32
      %p284 = scmp.eq.s32.totalorder %s283, 0
      %s286 = sadd.s32 %s285, 1
      %s287 = scalar_select %p284, %s285, %s286
      %p290 = pneg %p284
      %p291 = scmp.eq.s32.totalorder %s25, 1
      %p292 = por %p290, %p291
      %p293 = scmp.ne.s32.totalorder %s285, %s288
      %p294 = scmp.eq.s32.totalorder %s25, 0
      %p295 = por %p293, %p294
      %p296 = scmp.ne.s32.totalorder %s285, %s288
      %p297 = scmp.eq.s32.totalorder %s30, 1
      %p298 = por %p296, %p297
      %p299 = scmp.ne.s32.totalorder %s288, %s289
      %p300 = scmp.eq.s32.totalorder %s30, 0
      %p301 = por %p299, %p300
      %p302 = scmp.ne.s32.totalorder %s288, %s289
      %p303 = scmp.eq.s32.totalorder %s31, 1
      %p304 = por %p302, %p303
      %p306 = scmp.ne.s32.totalorder %s289, %s305
      %p307 = scmp.eq.s32.totalorder %s31, 0
      %p308 = por %p306, %p307
      %s309 = ssub.s32 %s25, %s32
      %p310 = scmp.eq.s32.totalorder %s309, 0
      %s312 = sadd.s32 %s311, 1
      %s313 = scalar_select %p310, %s311, %s312
      %p316 = pneg %p310
      %p317 = scmp.eq.s32.totalorder %s25, 1
      %p318 = por %p316, %p317
      %p319 = scmp.ne.s32.totalorder %s311, %s314
      %p320 = scmp.eq.s32.totalorder %s25, 0
      %p321 = por %p319, %p320
      %p322 = scmp.ne.s32.totalorder %s311, %s314
      %p323 = scmp.eq.s32.totalorder %s30, 1
      %p324 = por %p322, %p323
      %p325 = scmp.ne.s32.totalorder %s314, %s315
      %p326 = scmp.eq.s32.totalorder %s30, 0
      %p327 = por %p325, %p326
      %p328 = scmp.ne.s32.totalorder %s314, %s315
      %p329 = scmp.eq.s32.totalorder %s31, 1
      %p330 = por %p328, %p329
      %p332 = scmp.ne.s32.totalorder %s315, %s331
      %p333 = scmp.eq.s32.totalorder %s31, 0
      %p334 = por %p332, %p333
      %s335 = ssub.s32 %s25, %s32
      %p336 = scmp.eq.s32.totalorder %s335, 0
      %s338 = sadd.s32 %s337, 1
      %s339 = scalar_select %p336, %s337, %s338
      %p342 = pneg %p336
      %p343 = scmp.eq.s32.totalorder %s25, 1
      %p344 = por %p342, %p343
      %p345 = scmp.ne.s32.totalorder %s337, %s340
      %p346 = scmp.eq.s32.totalorder %s25, 0
      %p347 = por %p345, %p346
      %p348 = scmp.ne.s32.totalorder %s337, %s340
      %p349 = scmp.eq.s32.totalorder %s30, 1
      %p350 = por %p348, %p349
      %p351 = scmp.ne.s32.totalorder %s340, %s341
      %p352 = scmp.eq.s32.totalorder %s30, 0
      %p353 = por %p351, %p352
      %p354 = scmp.ne.s32.totalorder %s340, %s341
      %p355 = scmp.eq.s32.totalorder %s31, 1
      %p356 = por %p354, %p355
      %p358 = scmp.ne.s32.totalorder %s341, %s357
      %p359 = scmp.eq.s32.totalorder %s31, 0
      %p360 = por %p358, %p359
      %s361 = ssub.s32 %s25, %s32
      %p362 = scmp.eq.s32.totalorder %s361, 0
      %s364 = sadd.s32 %s363, 1
      %s365 = scalar_select %p362, %s363, %s364
      %p368 = pneg %p362
      %p369 = scmp.eq.s32.totalorder %s25, 1
      %p370 = por %p368, %p369
      %p371 = scmp.ne.s32.totalorder %s363, %s366
      %p372 = scmp.eq.s32.totalorder %s25, 0
      %p373 = por %p371, %p372
      %p374 = scmp.ne.s32.totalorder %s363, %s366
      %p375 = scmp.eq.s32.totalorder %s30, 1
      %p376 = por %p374, %p375
      %p377 = scmp.ne.s32.totalorder %s366, %s367
      %p378 = scmp.eq.s32.totalorder %s30, 0
      %p379 = por %p377, %p378
      %p380 = scmp.ne.s32.totalorder %s366, %s367
      %p381 = scmp.eq.s32.totalorder %s31, 1
      %p382 = por %p380, %p381
      %p384 = scmp.ne.s32.totalorder %s367, %s383
      %p385 = scmp.eq.s32.totalorder %s31, 0
      %p386 = por %p384, %p385
      %s388 = sadd.s32 %s387, 1
      %p391 = scmp.eq.s32.totalorder %s25, 1
      %p392 = scmp.ne.s32.totalorder %s387, %s389
      %p393 = scmp.eq.s32.totalorder %s25, 0
      %p394 = por %p392, %p393
      %p395 = scmp.ne.s32.totalorder %s387, %s389
      %p396 = scmp.eq.s32.totalorder %s30, 1
      %p397 = por %p395, %p396
      %p398 = scmp.ne.s32.totalorder %s389, %s390
      %p399 = scmp.eq.s32.totalorder %s30, 0
      %p400 = por %p398, %p399
      %p401 = scmp.ne.s32.totalorder %s389, %s390
      %p402 = scmp.eq.s32.totalorder %s31, 1
      %p403 = por %p401, %p402
      %p405 = scmp.ne.s32.totalorder %s390, %s404
      %p406 = scmp.eq.s32.totalorder %s31, 0
      %p407 = por %p405, %p406
      %s409 = sadd.s32 %s408, 1
      %p412 = scmp.eq.s32.totalorder %s25, 1
      %p413 = scmp.ne.s32.totalorder %s408, %s410
      %p414 = scmp.eq.s32.totalorder %s25, 0
      %p415 = por %p413, %p414
      %p416 = scmp.ne.s32.totalorder %s408, %s410
      %p417 = scmp.eq.s32.totalorder %s30, 1
      %p418 = por %p416, %p417
      %p419 = scmp.ne.s32.totalorder %s410, %s411
      %p420 = scmp.eq.s32.totalorder %s30, 0
      %p421 = por %p419, %p420
      %p422 = scmp.ne.s32.totalorder %s410, %s411
      %p423 = scmp.eq.s32.totalorder %s31, 1
      %p424 = por %p422, %p423
      %p426 = scmp.ne.s32.totalorder %s411, %s425
      %p427 = scmp.eq.s32.totalorder %s31, 0
      %p428 = por %p426, %p427
      %s430 = sadd.s32 %s429, 1
      %p433 = scmp.eq.s32.totalorder %s25, 1
      %p434 = scmp.ne.s32.totalorder %s429, %s431
      %p435 = scmp.eq.s32.totalorder %s25, 0
      %p436 = por %p434, %p435
      %p437 = scmp.ne.s32.totalorder %s429, %s431
      %p438 = scmp.eq.s32.totalorder %s30, 1
      %p439 = por %p437, %p438
      %p440 = scmp.ne.s32.totalorder %s431, %s432
      %p441 = scmp.eq.s32.totalorder %s30, 0
      %p442 = por %p440, %p441
      %p443 = scmp.ne.s32.totalorder %s431, %s432
      %p444 = scmp.eq.s32.totalorder %s31, 1
      %p445 = por %p443, %p444
      %p447 = scmp.ne.s32.totalorder %s432, %s446
      %p448 = scmp.eq.s32.totalorder %s31, 0
      %p449 = por %p447, %p448
      %p450 = scmp.le.s32.totalorder 1, %s25
      %p451 = scmp.lt.s32.totalorder %s25, 3
      %p452 = pnand %p450, %p451
      %p453 = pneg %p452
      // Predicated region
      $region9: #{tpu_custom_call.1} parent=5 // pred_check
        _
      $region10: #{tpu_custom_call.1} parent=5 // pred_check_branch
        %455 = sbr.rel (%p452) target = $region12
      $region11: #{tpu_custom_call.1} parent=5 // pred_region
        %s456 = ssub.s32 %s25, 1
        // Predicated region
        $region13: #{tpu_custom_call.1} parent=11 // pred_check
          %p457 = pneg %p46
        $region14: #{tpu_custom_call.1} parent=11 // pred_check_branch
          %459 = sbr.rel (%p457) target = $region16
        $region15: #{tpu_custom_call.1} parent=11 // pred_region
          %461 = vsyncadd [#allocation4], 0
          %s462 = sshll.u32 %s0, 4
          %s463 = int_to_ptr.hbm [resolvable:$true] %s462
          %s464 = sshll.u32 [#allocation3], 4
          %s465 = int_to_ptr.vmem [resolvable:$true] %s464
          %470 = dma.hbm_to_vmem [thread:$0]  %s463, 256, %s465, [#allocation4], 128, 128, 8
        $region16: #{tpu_custom_call.1} parent=11 // pred_fallthru
          _
        // Predicated region
        $region17: #{tpu_custom_call.1} parent=11 // pred_check
          %p471 = pneg %p67
        $region18: #{tpu_custom_call.1} parent=11 // pred_check_branch
          %473 = sbr.rel (%p471) target = $region20
        $region19: #{tpu_custom_call.1} parent=11 // pred_region
          %475 = vsyncadd [#allocation7], 0
          %s477 = sshll.u32 %s1, 4
          %s478 = int_to_ptr.hbm [resolvable:$true] %s477
          %s479 = sshll.u32 [#allocation6], 4
          %s480 = int_to_ptr.vmem [resolvable:$true] %s479
          %482 = dma.hbm_to_vmem [thread:$0]  %s478, 128, %s480, [#allocation7]
        $region20: #{tpu_custom_call.1} parent=11 // pred_fallthru
          _
        // Predicated region
        $region21: #{tpu_custom_call.1} parent=11 // pred_check
          %p483 = pneg %p400
        $region22: #{tpu_custom_call.1} parent=11 // pred_check_branch
          %485 = sbr.rel (%p483) target = $region24
        $region23: #{tpu_custom_call.1} parent=11 // pred_region
          %487 = vsyncadd [#allocation7], 0
          %s488 = sshll.u32 %s14, 4
          %s489 = int_to_ptr.hbm [resolvable:$true] %s488
          %s490 = sshll.u32 [#allocation11], 4
          %s491 = int_to_ptr.vmem [resolvable:$true] %s490
          %496 = dma.hbm_to_vmem [thread:$0]  %s489, 512, %s491, [#allocation7], 128, 128, 8
        $region24: #{tpu_custom_call.1} parent=11 // pred_fallthru
          _
        // Predicated region
        $region25: #{tpu_custom_call.1} parent=11 // pred_check
          %p497 = pneg %p421
        $region26: #{tpu_custom_call.1} parent=11 // pred_check_branch
          %499 = sbr.rel (%p497) target = $region28
        $region27: #{tpu_custom_call.1} parent=11 // pred_region
          _
        $region28: #{tpu_custom_call.1} parent=11 // pred_fallthru
          _
      $region12: #{tpu_custom_call.1} parent=5 // pred_fallthru
        _
      %p500 = scmp.lt.s32.totalorder %s25, 2
      // Predicated region
      $region29: #{tpu_custom_call.1} parent=5 // pred_check
        %p501 = pneg %p500
      $region30: #{tpu_custom_call.1} parent=5 // pred_check_branch
        %503 = sbr.rel (%p501) target = $region32
      $region31: #{tpu_custom_call.1} parent=5 // pred_region
        // Predicated region
        $region33: #{tpu_custom_call.1} parent=31 // pred_check
          %p504 = pneg %p87
        $region34: #{tpu_custom_call.1} parent=31 // pred_check_branch
          %506 = sbr.rel (%p504) target = $region36
        $region35: #{tpu_custom_call.1} parent=31 // pred_region
          %p507 = scmp.lt.s32.totalorder %s25, 1
          %s508 = scalar_select %p507, %s25, 1
          %s509 = smul.addr %s508, 4
          %s510 = smul.addr %s509, 8
          %s511 = scalar_lea.vmem %s2, %s510
        $region36: #{tpu_custom_call.1} parent=31 // pred_fallthru
          _
        // Predicated region
        $region37: #{tpu_custom_call.1} parent=31 // pred_check
          %p512 = pneg %p113
        $region38: #{tpu_custom_call.1} parent=31 // pred_check_branch
          %514 = sbr.rel (%p512) target = $region40
        $region39: #{tpu_custom_call.1} parent=31 // pred_region
          %p515 = scmp.lt.s32.totalorder %s25, 1
          %s516 = scalar_select %p515, %s25, 1
          %s517 = scalar_lea.vmem %s3, %s516
        $region40: #{tpu_custom_call.1} parent=31 // pred_fallthru
          _
        // Predicated region
        $region41: #{tpu_custom_call.1} parent=31 // pred_check
          %p518 = pneg %p139
        $region42: #{tpu_custom_call.1} parent=31 // pred_check_branch
          %520 = sbr.rel (%p518) target = $region44
        $region43: #{tpu_custom_call.1} parent=31 // pred_region
          %p521 = scmp.lt.s32.totalorder %s25, 1
          %s522 = scalar_select %p521, %s25, 1
          %s523 = smul.addr %s522, 4
          %s524 = smul.addr %s523, 8
          %s525 = scalar_lea.vmem %s4, %s524
        $region44: #{tpu_custom_call.1} parent=31 // pred_fallthru
          _
        // Predicated region
        $region45: #{tpu_custom_call.1} parent=31 // pred_check
          %p526 = pneg %p165
        $region46: #{tpu_custom_call.1} parent=31 // pred_check_branch
          %528 = sbr.rel (%p526) target = $region48
        $region47: #{tpu_custom_call.1} parent=31 // pred_region
          %s529 = sand.u32 %s25, 1
          %s530 = scalar_lea.sflag [#allocation4], %s529
          %s531 = sand.u32 %s155, 1
          %s532 = scalar_lea.vmem [#allocation8], %s531
          %534 = vsyncadd %s530, 0
          %s535 = scalar_lea.hbm %s5, %s25
          %s537 = sshll.u32 %s535, 4
          %s538 = int_to_ptr.hbm [resolvable:$true] %s537
          %s539 = sshll.u32 %s532, 4
          %s540 = int_to_ptr.vmem [resolvable:$true] %s539
          %542 = dma.hbm_to_vmem [thread:$0]  %s538, 16, %s540, %s530
        $region48: #{tpu_custom_call.1} parent=31 // pred_fallthru
          _
        // Predicated region
        $region49: #{tpu_custom_call.1} parent=31 // pred_check
          %p543 = pneg %p191
        $region50: #{tpu_custom_call.1} parent=31 // pred_check_branch
          %545 = sbr.rel (%p543) target = $region52
        $region51: #{tpu_custom_call.1} parent=31 // pred_region
          %p546 = scmp.lt.s32.totalorder %s25, 1
          %s547 = scalar_select %p546, %s25, 1
          %s548 = scalar_lea.vmem %s6, %s547
        $region52: #{tpu_custom_call.1} parent=31 // pred_fallthru
          _
        // Predicated region
        $region53: #{tpu_custom_call.1} parent=31 // pred_check
          %p549 = pneg %p217
        $region54: #{tpu_custom_call.1} parent=31 // pred_check_branch
          %551 = sbr.rel (%p549) target = $region56
        $region55: #{tpu_custom_call.1} parent=31 // pred_region
          %s552 = sand.u32 %s25, 1
          %s553 = scalar_lea.sflag [#allocation4], %s552
          %s554 = sand.u32 %s207, 1
          %s555 = scalar_lea.vmem [#allocation9], %s554
          %557 = vsyncadd %s553, 0
          %s558 = scalar_lea.hbm %s7, %s25
          %s560 = sshll.u32 %s558, 4
          %s561 = int_to_ptr.hbm [resolvable:$true] %s560
          %s562 = sshll.u32 %s555, 4
          %s563 = int_to_ptr.vmem [resolvable:$true] %s562
          %565 = dma.hbm_to_vmem [thread:$0]  %s561, 16, %s563, %s553
        $region56: #{tpu_custom_call.1} parent=31 // pred_fallthru
          _
        // Predicated region
        $region57: #{tpu_custom_call.1} parent=31 // pred_check
          %p566 = pneg %p243
        $region58: #{tpu_custom_call.1} parent=31 // pred_check_branch
          %568 = sbr.rel (%p566) target = $region60
        $region59: #{tpu_custom_call.1} parent=31 // pred_region
          %p569 = scmp.lt.s32.totalorder %s25, 1
          %s570 = scalar_select %p569, %s25, 1
          %s571 = smul.addr %s570, 4
          %s572 = smul.addr %s571, 8
          %s573 = scalar_lea.vmem %s8, %s572
        $region60: #{tpu_custom_call.1} parent=31 // pred_fallthru
          _
        // Predicated region
        $region61: #{tpu_custom_call.1} parent=31 // pred_check
          %p574 = pneg %p269
        $region62: #{tpu_custom_call.1} parent=31 // pred_check_branch
          %576 = sbr.rel (%p574) target = $region64
        $region63: #{tpu_custom_call.1} parent=31 // pred_region
          %p577 = scmp.lt.s32.totalorder %s25, 1
          %s578 = scalar_select %p577, %s25, 1
          %s579 = scalar_lea.vmem %s9, %s578
        $region64: #{tpu_custom_call.1} parent=31 // pred_fallthru
          _
        // Predicated region
        $region65: #{tpu_custom_call.1} parent=31 // pred_check
          %p580 = pneg %p295
        $region66: #{tpu_custom_call.1} parent=31 // pred_check_branch
          %582 = sbr.rel (%p580) target = $region68
        $region67: #{tpu_custom_call.1} parent=31 // pred_region
          %p583 = scmp.lt.s32.totalorder %s25, 1
          %s584 = scalar_select %p583, %s25, 1
          %s585 = smul.addr %s584, 8
          %s586 = smul.addr %s585, 8
          %s587 = scalar_lea.vmem %s10, %s586
        $region68: #{tpu_custom_call.1} parent=31 // pred_fallthru
          _
        // Predicated region
        $region69: #{tpu_custom_call.1} parent=31 // pred_check
          %p588 = pneg %p321
        $region70: #{tpu_custom_call.1} parent=31 // pred_check_branch
          %590 = sbr.rel (%p588) target = $region72
        $region71: #{tpu_custom_call.1} parent=31 // pred_region
          %p591 = scmp.lt.s32.totalorder %s25, 1
          %s592 = scalar_select %p591, %s25, 1
          %s593 = scalar_lea.vmem %s11, %s592
        $region72: #{tpu_custom_call.1} parent=31 // pred_fallthru
          _
        // Predicated region
        $region73: #{tpu_custom_call.1} parent=31 // pred_check
          %p594 = pneg %p347
        $region74: #{tpu_custom_call.1} parent=31 // pred_check_branch
          %596 = sbr.rel (%p594) target = $region76
        $region75: #{tpu_custom_call.1} parent=31 // pred_region
          %p597 = scmp.lt.s32.totalorder %s25, 1
          %s598 = scalar_select %p597, %s25, 1
          %s599 = scalar_lea.vmem %s12, %s598
        $region76: #{tpu_custom_call.1} parent=31 // pred_fallthru
          _
        // Predicated region
        $region77: #{tpu_custom_call.1} parent=31 // pred_check
          %p600 = pneg %p373
        $region78: #{tpu_custom_call.1} parent=31 // pred_check_branch
          %602 = sbr.rel (%p600) target = $region80
        $region79: #{tpu_custom_call.1} parent=31 // pred_region
          %s603 = sand.u32 %s25, 1
          %s604 = scalar_lea.sflag [#allocation4], %s603
          %s605 = sand.u32 %s363, 1
          %s606 = scalar_lea.vmem [#allocation10], %s605
          %608 = vsyncadd %s604, 0
          %s609 = scalar_lea.hbm %s13, %s25
          %s611 = sshll.u32 %s609, 4
          %s612 = int_to_ptr.hbm [resolvable:$true] %s611
          %s613 = sshll.u32 %s606, 4
          %s614 = int_to_ptr.vmem [resolvable:$true] %s613
          %616 = dma.hbm_to_vmem [thread:$0]  %s612, 16, %s614, %s604
        $region80: #{tpu_custom_call.1} parent=31 // pred_fallthru
          _
      $region32: #{tpu_custom_call.1} parent=5 // pred_fallthru
        _
      %p617 = scmp.le.s32.totalorder 1, %s25
      %p618 = scmp.lt.s32.totalorder %s25, 3
      %p619 = pnand %p617, %p618
      %p620 = pneg %p619
      // Predicated region
      $region81: #{tpu_custom_call.1} parent=5 // pred_check
        _
      $region82: #{tpu_custom_call.1} parent=5 // pred_check_branch
        %622 = sbr.rel (%p619) target = $region84
      $region83: #{tpu_custom_call.1} parent=5 // pred_region
        %s623 = ssub.s32 %s25, 1
        // Predicated region
        $region85: #{tpu_custom_call.1} parent=83 // pred_check
          %p624 = pneg %p46
        $region86: #{tpu_custom_call.1} parent=83 // pred_check_branch
          %626 = sbr.rel (%p624) target = $region88
        $region87: #{tpu_custom_call.1} parent=83 // pred_region
          %628 = dma.done [#allocation4], 256
        $region88: #{tpu_custom_call.1} parent=83 // pred_fallthru
          _
        // Predicated region
        $region89: #{tpu_custom_call.1} parent=83 // pred_check
          %p629 = pneg %p67
        $region90: #{tpu_custom_call.1} parent=83 // pred_check_branch
          %631 = sbr.rel (%p629) target = $region92
        $region91: #{tpu_custom_call.1} parent=83 // pred_region
          %633 = dma.done [#allocation7], 128
        $region92: #{tpu_custom_call.1} parent=83 // pred_fallthru
          _
        %s634 = sand.u32 %s30, 1
        %s635 = scalar_lea.sflag [#allocation4], %s634
        %s636 = sand.u32 %s158, 1
        %s637 = scalar_lea.vmem [#allocation8], %s636
        // Predicated region
        $region93: #{tpu_custom_call.1} parent=83 // pred_check
          %p638 = pneg %p171
        $region94: #{tpu_custom_call.1} parent=83 // pred_check_branch
          %640 = sbr.rel (%p638) target = $region96
        $region95: #{tpu_custom_call.1} parent=83 // pred_region
          %642 = dma.done %s635, 16
        $region96: #{tpu_custom_call.1} parent=83 // pred_fallthru
          _
        %s643 = sand.u32 %s30, 1
        %s644 = scalar_lea.sflag [#allocation4], %s643
        %s645 = sand.u32 %s210, 1
        %s646 = scalar_lea.vmem [#allocation9], %s645
        // Predicated region
        $region97: #{tpu_custom_call.1} parent=83 // pred_check
          %p647 = pneg %p223
        $region98: #{tpu_custom_call.1} parent=83 // pred_check_branch
          %649 = sbr.rel (%p647) target = $region100
        $region99: #{tpu_custom_call.1} parent=83 // pred_region
          %651 = dma.done %s644, 16
        $region100: #{tpu_custom_call.1} parent=83 // pred_fallthru
          _
        %s652 = sand.u32 %s30, 1
        %s653 = scalar_lea.sflag [#allocation4], %s652
        %s654 = sand.u32 %s366, 1
        %s655 = scalar_lea.vmem [#allocation10], %s654
        // Predicated region
        $region101: #{tpu_custom_call.1} parent=83 // pred_check
          %p656 = pneg %p379
        $region102: #{tpu_custom_call.1} parent=83 // pred_check_branch
          %658 = sbr.rel (%p656) target = $region104
        $region103: #{tpu_custom_call.1} parent=83 // pred_region
          %660 = dma.done %s653, 16
        $region104: #{tpu_custom_call.1} parent=83 // pred_fallthru
          _
        // Predicated region
        $region105: #{tpu_custom_call.1} parent=83 // pred_check
          %p661 = pneg %p400
        $region106: #{tpu_custom_call.1} parent=83 // pred_check_branch
          %663 = sbr.rel (%p661) target = $region108
        $region107: #{tpu_custom_call.1} parent=83 // pred_region
          %665 = dma.done [#allocation7], 512
        $region108: #{tpu_custom_call.1} parent=83 // pred_fallthru
          _
        %p666 = pneg %p46
        %p667 = pneg %p43
        %p668 = pneg %p67
        %p669 = pneg %p64
        %p670 = scmp.lt.s32.totalorder %s30, 1
        %s671 = scalar_select %p670, %s30, 1
        %s672 = smul.addr %s671, 4
        %s673 = smul.addr %s672, 8
        %s674 = scalar_lea.vmem %s2, %s673
        %p675 = pneg %p93
        %p676 = pneg %p90
        %p677 = scmp.lt.s32.totalorder %s30, 1
        %s678 = scalar_select %p677, %s30, 1
        %s679 = scalar_lea.vmem %s3, %s678
        %p680 = pneg %p119
        %p681 = pneg %p116
        %p682 = scmp.lt.s32.totalorder %s30, 1
        %s683 = scalar_select %p682, %s30, 1
        %s684 = smul.addr %s683, 4
        %s685 = smul.addr %s684, 8
        %s686 = scalar_lea.vmem %s4, %s685
        %p687 = pneg %p145
        %p688 = pneg %p142
        %s689 = sand.u32 %s30, 1
        %s690 = scalar_lea.sflag [#allocation4], %s689
        %s691 = sand.u32 %s158, 1
        %s692 = scalar_lea.vmem [#allocation8], %s691
        %p693 = pneg %p171
        %p694 = pneg %p168
        %p695 = scmp.lt.s32.totalorder %s30, 1
        %s696 = scalar_select %p695, %s30, 1
        %s697 = scalar_lea.vmem %s6, %s696
        %p698 = pneg %p197
        %p699 = pneg %p194
        %s700 = sand.u32 %s30, 1
        %s701 = scalar_lea.sflag [#allocation4], %s700
        %s702 = sand.u32 %s210, 1
        %s703 = scalar_lea.vmem [#allocation9], %s702
        %p704 = pneg %p223
        %p705 = pneg %p220
        %p706 = scmp.lt.s32.totalorder %s30, 1
        %s707 = scalar_select %p706, %s30, 1
        %s708 = smul.addr %s707, 4
        %s709 = smul.addr %s708, 8
        %s710 = scalar_lea.vmem %s8, %s709
        %p711 = pneg %p249
        %p712 = pneg %p246
        %p713 = scmp.lt.s32.totalorder %s30, 1
        %s714 = scalar_select %p713, %s30, 1
        %s715 = scalar_lea.vmem %s9, %s714
        %p716 = pneg %p275
        %p717 = pneg %p272
        %p718 = scmp.lt.s32.totalorder %s30, 1
        %s719 = scalar_select %p718, %s30, 1
        %s720 = smul.addr %s719, 8
        %s721 = smul.addr %s720, 8
        %s722 = scalar_lea.vmem %s10, %s721
        %p723 = pneg %p301
        %p724 = pneg %p298
        %p725 = scmp.lt.s32.totalorder %s30, 1
        %s726 = scalar_select %p725, %s30, 1
        %s727 = scalar_lea.vmem %s11, %s726
        %p728 = pneg %p327
        %p729 = pneg %p324
        %p730 = scmp.lt.s32.totalorder %s30, 1
        %s731 = scalar_select %p730, %s30, 1
        %s732 = scalar_lea.vmem %s12, %s731
        %p733 = pneg %p353
        %p734 = pneg %p350
        %s735 = sand.u32 %s30, 1
        %s736 = scalar_lea.sflag [#allocation4], %s735
        %s737 = sand.u32 %s366, 1
        %s738 = scalar_lea.vmem [#allocation10], %s737
        %p739 = pneg %p379
        %p740 = pneg %p376
        %p741 = pneg %p400
        %p742 = pneg %p397
        %p743 = pneg %p421
        %p744 = pneg %p418
        %p745 = pneg %p442
        %p746 = pneg %p439
        %p747 = scmp.lt.s32.totalorder %s30, 1
        %s748 = scalar_select %p747, %s30, 1
        %s749 = smul.addr %s748, 4
        %s750 = smul.addr %s749, 8
        %s751 = scalar_lea.vmem %s2, %s750
        %p752 = scmp.lt.s32.totalorder %s30, 1
        %s753 = scalar_select %p752, %s30, 1
        %s754 = scalar_lea.vmem %s3, %s753
        %p755 = scmp.lt.s32.totalorder %s30, 1
        %s756 = scalar_select %p755, %s30, 1
        %s757 = smul.addr %s756, 4
        %s758 = smul.addr %s757, 8
        %s759 = scalar_lea.vmem %s4, %s758
        %p760 = scmp.lt.s32.totalorder %s30, 1
        %s761 = scalar_select %p760, %s30, 1
        %s762 = scalar_lea.vmem %s6, %s761
        %p763 = scmp.lt.s32.totalorder %s30, 1
        %s764 = scalar_select %p763, %s30, 1
        %s765 = smul.addr %s764, 4
        %s766 = smul.addr %s765, 8
        %s767 = scalar_lea.vmem %s8, %s766
        %p768 = scmp.lt.s32.totalorder %s30, 1
        %s769 = scalar_select %p768, %s30, 1
        %s770 = scalar_lea.vmem %s9, %s769
        %p771 = scmp.lt.s32.totalorder %s30, 1
        %s772 = scalar_select %p771, %s30, 1
        %s773 = smul.addr %s772, 8
        %s774 = smul.addr %s773, 8
        %s775 = scalar_lea.vmem %s10, %s774
        %p776 = scmp.lt.s32.totalorder %s30, 1
        %s777 = scalar_select %p776, %s30, 1
        %s778 = scalar_lea.vmem %s11, %s777
        %p779 = scmp.lt.s32.totalorder %s30, 1
        %s780 = scalar_select %p779, %s30, 1
        %s781 = scalar_lea.vmem %s12, %s780
        %p782 = scmp.eq.s32.totalorder %s30, 0
        // Predicated region
        $region109: #{tpu_custom_call.1} parent=83 // pred_check
          %p783 = pneg %p782
        $region110: #{tpu_custom_call.1} parent=83 // pred_check_branch
          %785 = sbr.rel (%p783) target = $region112
        $region111: #{tpu_custom_call.1} parent=83 // pred_region
          %v786 = vld [vmem:[#allocation3] sm:$0xff]
          %v787 = vld [vmem:[#allocation3 + $0x8] sm:$0xff]
          %vm788 = vcmask 261120
          %789 = vst.msk [vmem:[#allocation2] sm:$0xff] %vm788, %v786
          %790 = vst.msk [vmem:[#allocation2 + $0x8] sm:$0xff] %vm788, %v787
        $region112: #{tpu_custom_call.1} parent=83 // pred_fallthru
          _
        %v791 = vld [vmem:[#allocation2] sm:$0xff]
        %v792 = vld [vmem:[#allocation2 + $0x8] sm:$0xff]
        %v793 = vld [vmem:[%s751] sm:$0xff]
        %v794 = vld [vmem:[%s751 + $0x8] sm:$0xff]
        %v795 = vld [vmem:[%s751 + $0x10] sm:$0xff]
        %v796 = vld [vmem:[%s751 + $0x18] sm:$0xff]
        %v797 = vld [vmem:[%s754] sm:$0x1]
        %v799 = vperm.slane %v797, 0
        %vm801 = vcmask 261120
        %v803 = vsel %vm801, %v791, 0
        %v806 = vsel %vm801, %v792, 0
        %808 = vmatpush.msra.mxu0 0.0
        %809 = vmatpush.msra.mxu0 0.0
        %810 = vmatpush.msra.mxu0 0.0
        %811 = vmatpush.msra.mxu0 0.0
        %812 = vmatpush.msra.mxu0 0.0
        %813 = vmatpush.msra.mxu0 0.0
        %814 = vmatpush.msra.mxu0 0.0
        %815 = vmatpush.msra.mxu0 0.0
        %816 = vmatpush.msra.mxu0 0.0
        %817 = vmatpush.msra.mxu0 0.0
        %818 = vmatpush.msra.mxu0 0.0
        %819 = vmatpush.msra.mxu0 0.0
        %820 = vmatpush.msra.mxu0 %v796
        %821 = vmatpush.msra.mxu0 %v795
        %822 = vmatpush.msra.mxu0 %v794
        %823 = vmatpush.msra.mxu0 %v793
        %824 = vmatmul.f32.gmra.mxu0 %v803
        %v825 = vpop.f32.mrf.mxu0
        %v826 = vadd.f32 %v799, %v825
        %827 = vmatmul.f32.gmra.mxu0 %v806
        %v828 = vpop.f32.mrf.mxu0
        %v829 = vadd.f32 %v799, %v828
        %830 = vdwg.mxu0
        %v831 = vld [vmem:[#allocation6] sm:$0xff]
        %v832 = vmul.f32 %v826, 0.25
        %v833 = vmul.f32 %v829, 0.25
        %835 = vrot.lane.b32.xlu0 %v826, 96
        %v836 = vpop.permute.xlu0 %835
        %vm837 = vcmask 130048
        %v839 = vsel %vm837, %v832, 0
        %v841 = vsel %vm837, %v836, 0
        %843 = vmatpush.xpose.msra.mxu0 0.0
        %844 = vmatpush.xpose.msra.mxu0 0.0
        %845 = vmatpush.xpose.msra.mxu0 0.0
        %846 = vmatpush.xpose.msra.mxu0 0.0
        %847 = vmatpush.xpose.msra.mxu0 0.0
        %848 = vmatpush.xpose.msra.mxu0 0.0
        %849 = vmatpush.xpose.msra.mxu0 0.0
        %850 = vmatpush.xpose.msra.mxu0 0.0
        %851 = vmatpush.xpose.msra.mxu0 0.0
        %852 = vmatpush.xpose.msra.mxu0 0.0
        %853 = vmatpush.xpose.msra.mxu0 0.0
        %854 = vmatpush.xpose.msra.mxu0 0.0
        %855 = vmatpush.xpose.msra.mxu0 0.0
        %856 = vmatpush.xpose.msra.mxu0 0.0
        %857 = vmatpush.xpose.msra.mxu0 0.0
        %858 = vmatpush.xpose.msra.mxu0 %v841
        %859 = vmatmul.f32.gmra.mxu0 %v839
        %v860 = vpop.f32.mrf.mxu0
        %v861 = vadd.f32 %v831, %v860
        %862 = vdwg.mxu0
        %864 = vrot.lane.b32.xlu0 %v829, 96
        %v865 = vpop.permute.xlu0 %864
        %v867 = vsel %vm837, %v833, 0
        %v869 = vsel %vm837, %v865, 0
        %871 = vmatpush.xpose.msra.mxu0 0.0
        %872 = vmatpush.xpose.msra.mxu0 0.0
        %873 = vmatpush.xpose.msra.mxu0 0.0
        %874 = vmatpush.xpose.msra.mxu0 0.0
        %875 = vmatpush.xpose.msra.mxu0 0.0
        %876 = vmatpush.xpose.msra.mxu0 0.0
        %877 = vmatpush.xpose.msra.mxu0 0.0
        %878 = vmatpush.xpose.msra.mxu0 0.0
        %879 = vmatpush.xpose.msra.mxu0 0.0
        %880 = vmatpush.xpose.msra.mxu0 0.0
        %881 = vmatpush.xpose.msra.mxu0 0.0
        %882 = vmatpush.xpose.msra.mxu0 0.0
        %883 = vmatpush.xpose.msra.mxu0 0.0
        %884 = vmatpush.xpose.msra.mxu0 0.0
        %885 = vmatpush.xpose.msra.mxu0 0.0
        %886 = vmatpush.xpose.msra.mxu0 %v869
        %887 = vmatmul.f32.gmra.mxu0 %v867
        %v888 = vpop.f32.mrf.mxu0
        %v889 = vadd.f32 %v831, %v888
        %890 = vdwg.mxu0
        %vm891 = vcmask 64512
        %v892 = vsel %vm891, %v861, -inf
        %893 = vmax.xlane.f32.xlu0 %v892
        %v894 = vpop.xlane.xlu0 %893
        %v895 = vsel %vm891, %v889, -inf
        %896 = vmax.xlane.f32.xlu0 %v895
        %v897 = vpop.xlane.xlu0 %896
        %v898 = vsub.f32 %v861, %v894
        %v899 = vsub.f32 %v889, %v897
        %v900 = vmul.f32 %v898, 1.442695
        %v901 = vpow.pop %v900
        %v902 = vmul.f32 %v899, 1.442695
        %v903 = vpow.pop %v902
        %v904 = vsel %vm891, %v901, 0.0
        %905 = vadd.xlane.f32.xlu0 %v904
        %v906 = vpop.xlane.xlu0 %905
        %v907 = vsel %vm891, %v903, 0.0
        %908 = vadd.xlane.f32.xlu0 %v907
        %v909 = vpop.xlane.xlu0 %908
        %v910 = vrcp.pop %v906
        %v911 = vrcp.pop %v909
        %v912 = vmul.f32 %v901, %v910
        %v913 = vmul.f32 %v903, %v911
        %914 = vrot.lane.b32.xlu0 %v826, 64
        %v915 = vpop.permute.xlu0 %914
        %v918 = vsel %vm891, %v912, 0
        %920 = vmatpush.msra.mxu0 0.0
        %921 = vmatpush.msra.mxu0 0.0
        %922 = vmatpush.msra.mxu0 0.0
        %923 = vmatpush.msra.mxu0 0.0
        %924 = vmatpush.msra.mxu0 0.0
        %925 = vmatpush.msra.mxu0 0.0
        %926 = vmatpush.msra.mxu0 0.0
        %927 = vmatpush.msra.mxu0 0.0
        %928 = vmatpush.msra.mxu0 0.0
        %929 = vmatpush.msra.mxu0 0.0
        %930 = vmatpush.msra.mxu0 0.0
        %931 = vmatpush.msra.mxu0 0.0
        %932 = vmatpush.msra.mxu0 0.0
        %933 = vmatpush.msra.mxu0 0.0
        %934 = vmatpush.msra.mxu0 0.0
        %935 = vmatpush.msra.mxu0 %v915
        %936 = vmatmul.f32.gmra.mxu0 %v918
        %v937 = vpop.f32.mrf.mxu0
        %v938 = vadd.f32 0.0, %v937
        %939 = vdwg.mxu0
        %940 = vrot.lane.b32.xlu0 %v829, 64
        %v941 = vpop.permute.xlu0 %940
        %v944 = vsel %vm891, %v913, 0
        %946 = vmatpush.msra.mxu0 0.0
        %947 = vmatpush.msra.mxu0 0.0
        %948 = vmatpush.msra.mxu0 0.0
        %949 = vmatpush.msra.mxu0 0.0
        %950 = vmatpush.msra.mxu0 0.0
        %951 = vmatpush.msra.mxu0 0.0
        %952 = vmatpush.msra.mxu0 0.0
        %953 = vmatpush.msra.mxu0 0.0
        %954 = vmatpush.msra.mxu0 0.0
        %955 = vmatpush.msra.mxu0 0.0
        %956 = vmatpush.msra.mxu0 0.0
        %957 = vmatpush.msra.mxu0 0.0
        %958 = vmatpush.msra.mxu0 0.0
        %959 = vmatpush.msra.mxu0 0.0
        %960 = vmatpush.msra.mxu0 0.0
        %961 = vmatpush.msra.mxu0 %v941
        %962 = vmatmul.f32.gmra.mxu0 %v944
        %v963 = vpop.f32.mrf.mxu0
        %v964 = vadd.f32 0.0, %v963
        %965 = vdwg.mxu0
        %966 = vrot.lane.b32.xlu0 %v832, 112
        %v967 = vpop.permute.xlu0 %966
        %968 = vrot.lane.b32.xlu0 %v826, 80
        %v969 = vpop.permute.xlu0 %968
        %v970 = vsel %vm837, %v967, 0
        %v972 = vsel %vm837, %v969, 0
        %974 = vmatpush.xpose.msra.mxu0 0.0
        %975 = vmatpush.xpose.msra.mxu0 0.0
        %976 = vmatpush.xpose.msra.mxu0 0.0
        %977 = vmatpush.xpose.msra.mxu0 0.0
        %978 = vmatpush.xpose.msra.mxu0 0.0
        %979 = vmatpush.xpose.msra.mxu0 0.0
        %980 = vmatpush.xpose.msra.mxu0 0.0
        %981 = vmatpush.xpose.msra.mxu0 0.0
        %982 = vmatpush.xpose.msra.mxu0 0.0
        %983 = vmatpush.xpose.msra.mxu0 0.0
        %984 = vmatpush.xpose.msra.mxu0 0.0
        %985 = vmatpush.xpose.msra.mxu0 0.0
        %986 = vmatpush.xpose.msra.mxu0 0.0
        %987 = vmatpush.xpose.msra.mxu0 0.0
        %988 = vmatpush.xpose.msra.mxu0 0.0
        %989 = vmatpush.xpose.msra.mxu0 %v972
        %990 = vmatmul.f32.gmra.mxu0 %v970
        %v991 = vpop.f32.mrf.mxu0
        %v992 = vadd.f32 %v831, %v991
        %993 = vdwg.mxu0
        %994 = vrot.lane.b32.xlu0 %v833, 112
        %v995 = vpop.permute.xlu0 %994
        %996 = vrot.lane.b32.xlu0 %v829, 80
        %v997 = vpop.permute.xlu0 %996
        %v998 = vsel %vm837, %v995, 0
        %v1000 = vsel %vm837, %v997, 0
        %1002 = vmatpush.xpose.msra.mxu0 0.0
        %1003 = vmatpush.xpose.msra.mxu0 0.0
        %1004 = vmatpush.xpose.msra.mxu0 0.0
        %1005 = vmatpush.xpose.msra.mxu0 0.0
        %1006 = vmatpush.xpose.msra.mxu0 0.0
        %1007 = vmatpush.xpose.msra.mxu0 0.0
        %1008 = vmatpush.xpose.msra.mxu0 0.0
        %1009 = vmatpush.xpose.msra.mxu0 0.0
        %1010 = vmatpush.xpose.msra.mxu0 0.0
        %1011 = vmatpush.xpose.msra.mxu0 0.0
        %1012 = vmatpush.xpose.msra.mxu0 0.0
        %1013 = vmatpush.xpose.msra.mxu0 0.0
        %1014 = vmatpush.xpose.msra.mxu0 0.0
        %1015 = vmatpush.xpose.msra.mxu0 0.0
        %1016 = vmatpush.xpose.msra.mxu0 0.0
        %1017 = vmatpush.xpose.msra.mxu0 %v1000
        %1018 = vmatmul.f32.gmra.mxu0 %v998
        %v1019 = vpop.f32.mrf.mxu0
        %v1020 = vadd.f32 %v831, %v1019
        %1021 = vdwg.mxu0
        %v1022 = vsel %vm891, %v992, -inf
        %1023 = vmax.xlane.f32.xlu0 %v1022
        %v1024 = vpop.xlane.xlu0 %1023
        %v1025 = vsel %vm891, %v1020, -inf
        %1026 = vmax.xlane.f32.xlu0 %v1025
        %v1027 = vpop.xlane.xlu0 %1026
        %v1028 = vsub.f32 %v992, %v1024
        %v1029 = vsub.f32 %v1020, %v1027
        %v1030 = vmul.f32 %v1028, 1.442695
        %v1031 = vpow.pop %v1030
        %v1032 = vmul.f32 %v1029, 1.442695
        %v1033 = vpow.pop %v1032
        %v1034 = vsel %vm891, %v1031, 0.0
        %1035 = vadd.xlane.f32.xlu0 %v1034
        %v1036 = vpop.xlane.xlu0 %1035
        %v1037 = vsel %vm891, %v1033, 0.0
        %1038 = vadd.xlane.f32.xlu0 %v1037
        %v1039 = vpop.xlane.xlu0 %1038
        %v1040 = vrcp.pop %v1036
        %v1041 = vrcp.pop %v1039
        %v1042 = vmul.f32 %v1031, %v1040
        %v1043 = vmul.f32 %v1033, %v1041
        %1044 = vrot.lane.b32.xlu0 %v826, 48
        %v1045 = vpop.permute.xlu0 %1044
        %v1048 = vsel %vm891, %v1042, 0
        %1050 = vmatpush.msra.mxu0 0.0
        %1051 = vmatpush.msra.mxu0 0.0
        %1052 = vmatpush.msra.mxu0 0.0
        %1053 = vmatpush.msra.mxu0 0.0
        %1054 = vmatpush.msra.mxu0 0.0
        %1055 = vmatpush.msra.mxu0 0.0
        %1056 = vmatpush.msra.mxu0 0.0
        %1057 = vmatpush.msra.mxu0 0.0
        %1058 = vmatpush.msra.mxu0 0.0
        %1059 = vmatpush.msra.mxu0 0.0
        %1060 = vmatpush.msra.mxu0 0.0
        %1061 = vmatpush.msra.mxu0 0.0
        %1062 = vmatpush.msra.mxu0 0.0
        %1063 = vmatpush.msra.mxu0 0.0
        %1064 = vmatpush.msra.mxu0 0.0
        %1065 = vmatpush.msra.mxu0 %v1045
        %1066 = vmatmul.f32.gmra.mxu0 %v1048
        %v1067 = vpop.f32.mrf.mxu0
        %v1068 = vadd.f32 0.0, %v1067
        %1069 = vdwg.mxu0
        %1070 = vrot.lane.b32.xlu0 %v829, 48
        %v1071 = vpop.permute.xlu0 %1070
        %v1074 = vsel %vm891, %v1043, 0
        %1076 = vmatpush.msra.mxu0 0.0
        %1077 = vmatpush.msra.mxu0 0.0
        %1078 = vmatpush.msra.mxu0 0.0
        %1079 = vmatpush.msra.mxu0 0.0
        %1080 = vmatpush.msra.mxu0 0.0
        %1081 = vmatpush.msra.mxu0 0.0
        %1082 = vmatpush.msra.mxu0 0.0
        %1083 = vmatpush.msra.mxu0 0.0
        %1084 = vmatpush.msra.mxu0 0.0
        %1085 = vmatpush.msra.mxu0 0.0
        %1086 = vmatpush.msra.mxu0 0.0
        %1087 = vmatpush.msra.mxu0 0.0
        %1088 = vmatpush.msra.mxu0 0.0
        %1089 = vmatpush.msra.mxu0 0.0
        %1090 = vmatpush.msra.mxu0 0.0
        %1091 = vmatpush.msra.mxu0 %v1071
        %1092 = vmatmul.f32.gmra.mxu0 %v1074
        %v1093 = vpop.f32.mrf.mxu0
        %v1094 = vadd.f32 0.0, %v1093
        %1095 = vdwg.mxu0
        %1098 = vrot.lane.b32.xlu0 %v1068, 16
        %v1099 = vpop.permute.xlu0 %1098
        %1100 = vrot.lane.b32.xlu0 %v1094, 16
        %v1101 = vpop.permute.xlu0 %1100
        %v1104 = vsel %vm837, %v938, %v1099
        %v1105 = vsel %vm837, %v964, %v1101
        %v1106 = vld [vmem:[%s759] sm:$0xff]
        %v1107 = vld [vmem:[%s759 + $0x8] sm:$0xff]
        %v1108 = vld [vmem:[%s759 + $0x10] sm:$0xff]
        %v1109 = vld [vmem:[%s759 + $0x18] sm:$0xff]
        %v1110 = vld [vmem:[%s637] sm:$0x1]
        %v1112 = vperm.slane %v1110, 0
        %v1115 = vsel %vm801, %v1104, 0
        %v1118 = vsel %vm801, %v1105, 0
        %1120 = vmatpush.msra.mxu0 0.0
        %1121 = vmatpush.msra.mxu0 0.0
        %1122 = vmatpush.msra.mxu0 0.0
        %1123 = vmatpush.msra.mxu0 0.0
        %1124 = vmatpush.msra.mxu0 0.0
        %1125 = vmatpush.msra.mxu0 0.0
        %1126 = vmatpush.msra.mxu0 0.0
        %1127 = vmatpush.msra.mxu0 0.0
        %1128 = vmatpush.msra.mxu0 0.0
        %1129 = vmatpush.msra.mxu0 0.0
        %1130 = vmatpush.msra.mxu0 0.0
        %1131 = vmatpush.msra.mxu0 0.0
        %1132 = vmatpush.msra.mxu0 %v1109
        %1133 = vmatpush.msra.mxu0 %v1108
        %1134 = vmatpush.msra.mxu0 %v1107
        %1135 = vmatpush.msra.mxu0 %v1106
        %1136 = vmatmul.f32.gmra.mxu0 %v1115
        %v1137 = vpop.f32.mrf.mxu0
        %v1138 = vadd.f32 %v1112, %v1137
        %1139 = vmatmul.f32.gmra.mxu0 %v1118
        %v1140 = vpop.f32.mrf.mxu0
        %v1141 = vadd.f32 %v1112, %v1140
        %1142 = vdwg.mxu0
        %v1143 = vadd.f32 %v791, %v1138
        %v1144 = vadd.f32 %v792, %v1141
        %v1145 = vsel %vm801, %v1143, 0.0
        %1146 = vadd.xlane.f32.xlu0 %v1145
        %v1147 = vpop.xlane.xlu0 %1146
        %v1148 = vsel %vm801, %v1144, 0.0
        %1149 = vadd.xlane.f32.xlu0 %v1148
        %v1150 = vpop.xlane.xlu0 %1149
        %v1151 = vrcp.pop 32.0
        %v1152 = vmul.f32 32.0, %v1151
        %v1153 = vsub.f32 1.0, %v1152
        %v1154 = vmul.f32 %v1151, %v1153
        %v1155 = vadd.f32 %v1151, %v1154
        %vm1156 = vweird.f32 %v1151
        %v1157 = vsel %vm1156, %v1151, %v1155
        %v1158 = vmul.f32 %v1147, %v1157
        %v1159 = vmul.f32 %v1150, %v1157
        %v1160 = vsub.f32 %v1143, %v1158
        %v1161 = vsub.f32 %v1144, %v1159
        %v1162 = vmul.f32 %v1160, %v1160
        %v1163 = vmul.f32 %v1161, %v1161
        %v1164 = vsel %vm801, %v1162, 0.0
        %1165 = vadd.xlane.f32.xlu0 %v1164
        %v1166 = vpop.xlane.xlu0 %1165
        %v1167 = vsel %vm801, %v1163, 0.0
        %1168 = vadd.xlane.f32.xlu0 %v1167
        %v1169 = vpop.xlane.xlu0 %1168
        %v1170 = vmul.f32 %v1166, %v1157
        %v1171 = vmul.f32 %v1169, %v1157
        %v1172 = vadd.f32 %v1170, 1e-05
        %v1173 = vadd.f32 %v1171, 1e-05
        %v1174 = vrsqrt.pop %v1172
        %v1175 = vmul.f32 %v1174, %v1172
        %v1176 = vmul.f32 %v1175, %v1174
        %v1177 = vmul.f32 0.5, %v1176
        %v1178 = vsub.f32 1.5, %v1177
        %v1179 = vmul.f32 %v1174, %v1178
        %vm1180 = vweird.f32 %v1172
        %vm1181 = vweird.f32 %v1174
        %vm1182 = vmor %vm1180, %vm1181
        %v1183 = vsel %vm1182, %v1174, %v1179
        %v1184 = vrsqrt.pop %v1173
        %v1185 = vmul.f32 %v1184, %v1173
        %v1186 = vmul.f32 %v1185, %v1184
        %v1187 = vmul.f32 0.5, %v1186
        %v1188 = vsub.f32 1.5, %v1187
        %v1189 = vmul.f32 %v1184, %v1188
        %vm1190 = vweird.f32 %v1173
        %vm1191 = vweird.f32 %v1184
        %vm1192 = vmor %vm1190, %vm1191
        %v1193 = vsel %vm1192, %v1184, %v1189
        %v1194 = vmul.f32 %v1160, %v1183
        %v1195 = vmul.f32 %v1161, %v1193
        %v1196 = vld [vmem:[%s762] sm:$0x1]
        %v1198 = vperm.slane %v1196, 0
        %v1200 = vmul.f32 %v1194, %v1198
        %v1201 = vmul.f32 %v1195, %v1198
        %v1202 = vld [vmem:[%s646] sm:$0x1]
        %v1204 = vperm.slane %v1202, 0
        %v1206 = vadd.f32 %v1200, %v1204
        %v1207 = vadd.f32 %v1201, %v1204
        %v1208 = vld [vmem:[%s767] sm:$0xff]
        %v1209 = vld [vmem:[%s767 + $0x8] sm:$0xff]
        %v1210 = vld [vmem:[%s767 + $0x10] sm:$0xff]
        %v1211 = vld [vmem:[%s767 + $0x18] sm:$0xff]
        %v1212 = vld [vmem:[%s770] sm:$0x1]
        %v1214 = vperm.slane %v1212, 0
        %v1217 = vsel %vm801, %v1206, 0
        %v1220 = vsel %vm801, %v1207, 0
        %1222 = vmatpush.msra.mxu0 0.0
        %1223 = vmatpush.msra.mxu0 0.0
        %1224 = vmatpush.msra.mxu0 0.0
        %1225 = vmatpush.msra.mxu0 0.0
        %1226 = vmatpush.msra.mxu0 0.0
        %1227 = vmatpush.msra.mxu0 0.0
        %1228 = vmatpush.msra.mxu0 0.0
        %1229 = vmatpush.msra.mxu0 0.0
        %1230 = vmatpush.msra.mxu0 0.0
        %1231 = vmatpush.msra.mxu0 0.0
        %1232 = vmatpush.msra.mxu0 0.0
        %1233 = vmatpush.msra.mxu0 0.0
        %1234 = vmatpush.msra.mxu0 %v1211
        %1235 = vmatpush.msra.mxu0 %v1210
        %1236 = vmatpush.msra.mxu0 %v1209
        %1237 = vmatpush.msra.mxu0 %v1208
        %1238 = vmatmul.f32.gmra.mxu0 %v1217
        %v1239 = vpop.f32.mrf.mxu0
        %v1240 = vadd.f32 %v1214, %v1239
        %1241 = vmatmul.f32.gmra.mxu0 %v1220
        %v1242 = vpop.f32.mrf.mxu0
        %v1243 = vadd.f32 %v1214, %v1242
        %1244 = vdwg.mxu0
        %v1245 = vmax.f32 %v1240, 0.0
        %v1246 = vmax.f32 %v1243, 0.0
        %v1247 = vld [vmem:[%s775] sm:$0xff]
        %v1248 = vld [vmem:[%s775 + $0x8] sm:$0xff]
        %v1249 = vld [vmem:[%s775 + $0x10] sm:$0xff]
        %v1250 = vld [vmem:[%s775 + $0x18] sm:$0xff]
        %v1251 = vld [vmem:[%s775 + $0x20] sm:$0xff]
        %v1252 = vld [vmem:[%s775 + $0x28] sm:$0xff]
        %v1253 = vld [vmem:[%s775 + $0x30] sm:$0xff]
        %v1254 = vld [vmem:[%s775 + $0x38] sm:$0xff]
        %v1255 = vld [vmem:[%s778] sm:$0x1]
        %v1257 = vperm.slane %v1255, 0
        %vm1259 = vcmask 523264
        %v1261 = vsel %vm1259, %v1245, 0
        %v1264 = vsel %vm1259, %v1246, 0
        %1266 = vmatpush.msra.mxu0 0.0
        %1267 = vmatpush.msra.mxu0 0.0
        %1268 = vmatpush.msra.mxu0 0.0
        %1269 = vmatpush.msra.mxu0 0.0
        %1270 = vmatpush.msra.mxu0 0.0
        %1271 = vmatpush.msra.mxu0 0.0
        %1272 = vmatpush.msra.mxu0 0.0
        %1273 = vmatpush.msra.mxu0 0.0
        %1274 = vmatpush.msra.mxu0 %v1254
        %1275 = vmatpush.msra.mxu0 %v1253
        %1276 = vmatpush.msra.mxu0 %v1252
        %1277 = vmatpush.msra.mxu0 %v1251
        %1278 = vmatpush.msra.mxu0 %v1250
        %1279 = vmatpush.msra.mxu0 %v1249
        %1280 = vmatpush.msra.mxu0 %v1248
        %1281 = vmatpush.msra.mxu0 %v1247
        %1282 = vmatmul.f32.gmra.mxu0 %v1261
        %v1283 = vpop.f32.mrf.mxu0
        %v1284 = vadd.f32 %v1257, %v1283
        %1285 = vmatmul.f32.gmra.mxu0 %v1264
        %v1286 = vpop.f32.mrf.mxu0
        %v1287 = vadd.f32 %v1257, %v1286
        %1288 = vdwg.mxu0
        %v1289 = vadd.f32 %v1206, %v1284
        %v1290 = vadd.f32 %v1207, %v1287
        %v1291 = vsel %vm801, %v1289, 0.0
        %1292 = vadd.xlane.f32.xlu0 %v1291
        %v1293 = vpop.xlane.xlu0 %1292
        %v1294 = vsel %vm801, %v1290, 0.0
        %1295 = vadd.xlane.f32.xlu0 %v1294
        %v1296 = vpop.xlane.xlu0 %1295
        %v1297 = vmul.f32 %v1293, %v1157
        %v1298 = vmul.f32 %v1296, %v1157
        %v1299 = vsub.f32 %v1289, %v1297
        %v1300 = vsub.f32 %v1290, %v1298
        %v1301 = vmul.f32 %v1299, %v1299
        %v1302 = vmul.f32 %v1300, %v1300
        %v1303 = vsel %vm801, %v1301, 0.0
        %1304 = vadd.xlane.f32.xlu0 %v1303
        %v1305 = vpop.xlane.xlu0 %1304
        %v1306 = vsel %vm801, %v1302, 0.0
        %1307 = vadd.xlane.f32.xlu0 %v1306
        %v1308 = vpop.xlane.xlu0 %1307
        %v1309 = vmul.f32 %v1305, %v1157
        %v1310 = vmul.f32 %v1308, %v1157
        %v1311 = vadd.f32 %v1309, 1e-05
        %v1312 = vadd.f32 %v1310, 1e-05
        %v1313 = vrsqrt.pop %v1311
        %v1314 = vmul.f32 %v1313, %v1311
        %v1315 = vmul.f32 %v1314, %v1313
        %v1316 = vmul.f32 0.5, %v1315
        %v1317 = vsub.f32 1.5, %v1316
        %v1318 = vmul.f32 %v1313, %v1317
        %vm1319 = vweird.f32 %v1311
        %vm1320 = vweird.f32 %v1313
        %vm1321 = vmor %vm1319, %vm1320
        %v1322 = vsel %vm1321, %v1313, %v1318
        %v1323 = vrsqrt.pop %v1312
        %v1324 = vmul.f32 %v1323, %v1312
        %v1325 = vmul.f32 %v1324, %v1323
        %v1326 = vmul.f32 0.5, %v1325
        %v1327 = vsub.f32 1.5, %v1326
        %v1328 = vmul.f32 %v1323, %v1327
        %vm1329 = vweird.f32 %v1312
        %vm1330 = vweird.f32 %v1323
        %vm1331 = vmor %vm1329, %vm1330
        %v1332 = vsel %vm1331, %v1323, %v1328
        %v1333 = vmul.f32 %v1299, %v1322
        %v1334 = vmul.f32 %v1300, %v1332
        %v1335 = vld [vmem:[%s781] sm:$0x1]
        %v1337 = vperm.slane %v1335, 0
        %v1339 = vmul.f32 %v1333, %v1337
        %v1340 = vmul.f32 %v1334, %v1337
        %v1341 = vld [vmem:[%s655] sm:$0x1]
        %v1343 = vperm.slane %v1341, 0
        %v1345 = vadd.f32 %v1339, %v1343
        %v1346 = vadd.f32 %v1340, %v1343
        %1347 = vst.msk [vmem:[#allocation2] sm:$0xff] %vm801, %v1345
        %1348 = vst.msk [vmem:[#allocation2 + $0x8] sm:$0xff] %vm801, %v1346
        %p1349 = scmp.eq.s32.totalorder %s30, 1
        // Predicated region
        $region113: #{tpu_custom_call.1} parent=83 // pred_check
          %p1350 = pneg %p1349
        $region114: #{tpu_custom_call.1} parent=83 // pred_check_branch
          %1352 = sbr.rel (%p1350) target = $region116
        $region115: #{tpu_custom_call.1} parent=83 // pred_region
          %v1353 = vld [vmem:[#allocation11] sm:$0xff]
          %v1354 = vld [vmem:[#allocation11 + $0x8] sm:$0xff]
          %v1355 = vld [vmem:[#allocation11 + $0x10] sm:$0xff]
          %v1356 = vld [vmem:[#allocation11 + $0x18] sm:$0xff]
          %v1357 = vld [vmem:[%s15] sm:$0x1]
          %v1359 = vperm.slane %v1357, 0
          %v1362 = vsel %vm801, %v1345, 0
          %v1365 = vsel %vm801, %v1346, 0
          %1367 = vmatpush.msra.mxu0 0.0
          %1368 = vmatpush.msra.mxu0 0.0
          %1369 = vmatpush.msra.mxu0 0.0
          %1370 = vmatpush.msra.mxu0 0.0
          %1371 = vmatpush.msra.mxu0 0.0
          %1372 = vmatpush.msra.mxu0 0.0
          %1373 = vmatpush.msra.mxu0 0.0
          %1374 = vmatpush.msra.mxu0 0.0
          %1375 = vmatpush.msra.mxu0 0.0
          %1376 = vmatpush.msra.mxu0 0.0
          %1377 = vmatpush.msra.mxu0 0.0
          %1378 = vmatpush.msra.mxu0 0.0
          %1379 = vmatpush.msra.mxu0 %v1356
          %1380 = vmatpush.msra.mxu0 %v1355
          %1381 = vmatpush.msra.mxu0 %v1354
          %1382 = vmatpush.msra.mxu0 %v1353
          %1383 = vmatmul.f32.gmra.mxu0 %v1362
          %v1384 = vpop.f32.mrf.mxu0
          %v1385 = vadd.f32 %v1359, %v1384
          %1386 = vmatmul.f32.gmra.mxu0 %v1365
          %v1387 = vpop.f32.mrf.mxu0
          %v1388 = vadd.f32 %v1359, %v1387
          %1389 = vdwg.mxu0
          %1390 = vst [vmem:[#allocation12] sm:$0xff] %v1385
          %1391 = vst [vmem:[#allocation12 + $0x8] sm:$0xff] %v1388
        $region116: #{tpu_custom_call.1} parent=83 // pred_fallthru
          _
        // Predicated region
        $region117: #{tpu_custom_call.1} parent=83 // pred_check
          %p1392 = pneg %p439
        $region118: #{tpu_custom_call.1} parent=83 // pred_check_branch
          %1394 = sbr.rel (%p1392) target = $region120
        $region119: #{tpu_custom_call.1} parent=83 // pred_region
          %1396 = vsyncadd [#allocation5], 0
          %s1397 = sshll.u32 [#allocation12], 4
          %s1398 = int_to_ptr.vmem [resolvable:$true] %s1397
          %s1399 = sshll.u32 %s16, 4
          %s1400 = int_to_ptr.hbm [resolvable:$true] %s1399
          %1405 = dma.vmem_to_hbm [thread:$0]  %s1398, 256, %s1400, [#allocation5], 128, 128, 8
        $region120: #{tpu_custom_call.1} parent=83 // pred_fallthru
          _
        // Predicated region
        $region121: #{tpu_custom_call.1} parent=83 // pred_check
          %p1406 = pneg %p439
        $region122: #{tpu_custom_call.1} parent=83 // pred_check_branch
          %1408 = sbr.rel (%p1406) target = $region124
        $region123: #{tpu_custom_call.1} parent=83 // pred_region
          %1410 = dma.done [#allocation5], 256
        $region124: #{tpu_custom_call.1} parent=83 // pred_fallthru
          _
      $region84: #{tpu_custom_call.1} parent=5 // pred_fallthru
        _
      %p1411 = scmp.le.s32.totalorder 2, %s25
      // Predicated region
      $region125: #{tpu_custom_call.1} parent=5 // pred_check
        %p1412 = pneg %p1411
      $region126: #{tpu_custom_call.1} parent=5 // pred_check_branch
        %1414 = sbr.rel (%p1412) target = $region128
      $region127: #{tpu_custom_call.1} parent=5 // pred_region
        %s1415 = ssub.s32 %s25, 2
      $region128: #{tpu_custom_call.1} parent=5 // pred_fallthru
        _
    $region6: #{tpu_custom_call.1} parent=1 // loop_footer
      %s29 = sadd.s32 1, %s25
    $region7: #{tpu_custom_call.1} parent=1 // loop_footer_branch
      %24 = sbr.rel target = $region3
    $region8: #{tpu_custom_call.1} parent=1 // loop_exit
      _
    %1416 = vsyncpa [#allocation4], 1
    %s1417 = scalar_lea.sflag [#allocation4], 1
    %1418 = vsyncpa %s1417, 1
    %1419 = vsyncpa [#allocation7], 1
    %1420 = vsyncpa [#allocation5], 1
    %s1421 = scalar_lea.sflag [#allocation5], 1
    %1422 = vsyncpa %s1421, 1

</llo_original>
